<compile_context>
chip_gen: v7x
topology: tpu7x:2x2x1
jax: 0.10.0
libtpu: 0.0.40
codegen_flags: <defaults>
</compile_context>

<pallas_src>
import functools
import math

import jax
import jax.numpy as jnp
from jax.experimental import pallas as pl
from jax.experimental.pallas import tpu as pltpu


def _round_up(x, m):
    return (x + m - 1) // m * m


def _qkv_attn_kernel(q_ref, k_ref, v_ref, o_ref, *, scale_sq, kv_len):
    # q_ref/k_ref/v_ref/o_ref: (BH, C, T) VMEM tiles, in the input dtype.
    q = q_ref[...]
    k = k_ref[...]
    v = v_ref[...]

    # Apply the scale once (scale^2 == 1/sqrt(ch)), in the input dtype so the
    # first matmul stays a native-dtype MXU matmul (e.g. bf16 inputs).
    q = q * jnp.asarray(scale_sq, dtype=q.dtype)

    # logits[b, t, s] = sum_c q[b, c, t] * k[b, c, s]   (no explicit transpose)
    w = jax.lax.dot_general(
        q, k,
        dimension_numbers=(((1,), (1,)), ((0,), (0,))),
        preferred_element_type=jnp.float32,
    )  # (BH, T, T) f32

    # Mask padded key positions (only traced when the wrapper padded T).
    t_pad = w.shape[-1]
    if kv_len != t_pad:
        s_idx = jax.lax.broadcasted_iota(jnp.int32, w.shape, dimension=2)
        w = jnp.where(s_idx < kv_len, w, jnp.float32(-1e30))

    # Softmax over s, in f32 (matches the reference `.float()`).
    w = w - jnp.max(w, axis=-1, keepdims=True)
    w = jnp.exp(w)
    denom = jnp.sum(w, axis=-1, keepdims=True)
    r = pl.reciprocal(denom, approx=True)     # EUP vrcp (free slot)
    r = r * (2.0 - denom * r)                 # one Newton step -> ~f32 accuracy
    p = (w * r).astype(v.dtype)               # back to input dtype for the MXU

    # a[b, c, t] = sum_s p[b, t, s] * v[b, c, s]   (no explicit transpose)
    a = jax.lax.dot_general(
        v, p,
        dimension_numbers=(((2,), (2,)), ((0,), (0,))),
        preferred_element_type=jnp.float32,
    )  # (BH, C, T) f32
    o_ref[...] = a.astype(o_ref.dtype)


def _pick_heads_per_block(B, c_pad, t_pad, dtype, cap=16):
    """Largest divisor of B that keeps the per-step working set in budget."""
    itemsize = jnp.dtype(dtype).itemsize
    # 4 blocks (q/k/v/o) double-buffered + f32 logits & probs intermediates.
    per_head = 4 * 2 * c_pad * t_pad * itemsize + 2 * t_pad * t_pad * 4
    budget = 32 * 1024 * 1024
    max_bh = max(1, min(cap, budget // max(per_head, 1)))
    bh = 1
    for d in range(1, B + 1):
        if B % d == 0 and d <= max_bh:
            bh = d
    return bh


def qkv_attention_legacy(qkv, n_heads, *, heads_per_block=None):
    """qkv: [N, H*3*C, T] -> [N, H*C, T] (same semantics as QKVAttentionLegacy)."""
    bs, width, length = qkv.shape
    assert width % (3 * n_heads) == 0
    ch = width // (3 * n_heads)
    B = bs * n_heads
    dtype = qkv.dtype

    qkv_r = qkv.reshape(B, 3 * ch, length)
    q = qkv_r[:, 0 * ch:1 * ch, :]   # (B, C, T)
    k = qkv_r[:, 1 * ch:2 * ch, :]
    v = qkv_r[:, 2 * ch:3 * ch, :]

    scale_sq = 1.0 / math.sqrt(ch)   # == (1/ch**0.25)**2, applied once to q

    # Lane/sublane padding: T -> multiple of 128, C -> multiple of sublane tile.
    sublane = 16 if dtype == jnp.bfloat16 else 8
    t_pad = _round_up(length, 128)
    c_pad = _round_up(ch, sublane)
    if (t_pad, c_pad) != (length, ch):
        pad = ((0, 0), (0, c_pad - ch), (0, t_pad - length))
        q = jnp.pad(q, pad)
        k = jnp.pad(k, pad)
        v = jnp.pad(v, pad)

    bh = heads_per_block or _pick_heads_per_block(B, c_pad, t_pad, dtype)
    assert B % bh == 0

    spec = pl.BlockSpec((bh, c_pad, t_pad), lambda b: (b, 0, 0))

    itemsize = jnp.dtype(dtype).itemsize
    cost = pl.CostEstimate(
        flops=2 * 2 * B * c_pad * t_pad * t_pad,          # two matmuls
        transcendentals=B * t_pad * t_pad,                # exp in softmax
        bytes_accessed=4 * B * c_pad * t_pad * itemsize,  # q, k, v, o
    )

    kernel = functools.partial(_qkv_attn_kernel, scale_sq=scale_sq, kv_len=length)

    out = pl.pallas_call(
        kernel,
        out_shape=jax.ShapeDtypeStruct((B, c_pad, t_pad), dtype),
        grid_spec=pltpu.PrefetchScalarGridSpec(
            num_scalar_prefetch=0,
            grid=(B // bh,),
            in_specs=[spec, spec, spec],
            out_specs=spec,
        ),
        compiler_params=pltpu.CompilerParams(
            dimension_semantics=("parallel",),
            vmem_limit_bytes=48 * 1024 * 1024,
        ),
        cost_estimate=cost,
    )(q, k, v)

    out = out[:, :ch, :length]
    return out.reshape(bs, n_heads * ch, length)


def _reference(qkv, n_heads):
    bs, width, length = qkv.shape
    ch = width // (3 * n_heads)
    qkv_r = qkv.reshape(bs * n_heads, 3 * ch, length)
    q, k, v = qkv_r[:, :ch], qkv_r[:, ch:2 * ch], qkv_r[:, 2 * ch:]
    scale = 1.0 / math.sqrt(math.sqrt(ch))
    w = jnp.einsum('bct,bcs->bts', q * scale, k * scale)
    w = jax.nn.softmax(w.astype(jnp.float32), axis=-1).astype(w.dtype)
    a = jnp.einsum('bts,bcs->bct', w, v)
    return a.reshape(bs, -1, length)


if __name__ == "__main__":
    # Small, module-consistent shapes: N=2, heads=2, C=8 per head, T=16.
    n_heads = 2
    N, C, T = 2, 8, 16
    width = n_heads * 3 * C   # 48

    key = jax.random.PRNGKey(0)
    qkv = jax.random.normal(key, (N, width, T), dtype=jnp.float32)

    fn = jax.jit(functools.partial(qkv_attention_legacy, n_heads=n_heads))
    out = jax.block_until_ready(fn(qkv))

    ref = _reference(qkv, n_heads)
    assert out.shape == (N, n_heads * C, T)
    assert jnp.allclose(out, ref, atol=2e-5, rtol=2e-5)

    print("KERNEL_OK")
</pallas_src>

<mosaic_0001>
module attributes {stable_mosaic.version = 11 : i64} {
  func.func @_qkv_attn_kernel(%arg0: i32, %arg1: memref<4x8x128xf32, #tpu.memory_space<vmem>>, %arg2: memref<4x8x128xf32, #tpu.memory_space<vmem>>, %arg3: memref<4x8x128xf32, #tpu.memory_space<vmem>>, %arg4: memref<4x8x128xf32, #tpu.memory_space<vmem>>) attributes {dimension_semantics = [#tpu.dimension_semantics<parallel>], iteration_bounds = array<i64: 1>, scalar_prefetch = 0 : i64, scratch_operands = 0 : i64, tpu.core_type = #tpu.core_type<tc>, window_params = [{transform_indices = @transform_0, window_bounds = array<i64: 4, 8, 128>}, {transform_indices = @transform_1, window_bounds = array<i64: 4, 8, 128>}, {transform_indices = @transform_2, window_bounds = array<i64: 4, 8, 128>}, {transform_indices = @transform_3, window_bounds = array<i64: 4, 8, 128>}]} {
    %c0 = arith.constant 0 : index
    %c0_0 = arith.constant 0 : index
    %c0_1 = arith.constant 0 : index
    %0 = vector.load %arg1[%c0, %c0_0, %c0_1] : memref<4x8x128xf32, #tpu.memory_space<vmem>>, vector<4x8x128xf32>
    %c0_2 = arith.constant 0 : index
    %c0_3 = arith.constant 0 : index
    %c0_4 = arith.constant 0 : index
    %1 = vector.load %arg2[%c0_2, %c0_3, %c0_4] : memref<4x8x128xf32, #tpu.memory_space<vmem>>, vector<4x8x128xf32>
    %c0_5 = arith.constant 0 : index
    %c0_6 = arith.constant 0 : index
    %c0_7 = arith.constant 0 : index
    %2 = vector.load %arg3[%c0_5, %c0_6, %c0_7] : memref<4x8x128xf32, #tpu.memory_space<vmem>>, vector<4x8x128xf32>
    %cst = arith.constant 0.353553385 : f32
    %3 = vector.broadcast %cst : f32 to vector<4x8x128xf32>
    %4 = arith.mulf %0, %3 : vector<4x8x128xf32>
    %cst_8 = arith.constant dense<0.000000e+00> : vector<4x128x128xf32>
    %5 = tpu.matmul %4, %1, %cst_8 {dimension_numbers = #tpu.dot_dimension_numbers<[1], [1], [2], [2], [0, 0, 0, 2, 1, 2], [0], [0]>} : vector<4x8x128xf32>, vector<4x8x128xf32>, vector<4x128x128xf32> -> vector<4x128x128xf32>
    %6 = tpu.iota {dimensions = array<i32: 2>} : vector<4x128x128xi32>
    %c16_i32 = arith.constant 16 : i32
    %7 = vector.broadcast %c16_i32 : i32 to vector<4x128x128xi32>
    %8 = arith.cmpi slt, %6, %7 : vector<4x128x128xi32>
    %cst_9 = arith.constant -1.000000e+30 : f32
    %9 = vector.broadcast %cst_9 : f32 to vector<4x128x128xf32>
    %10 = arith.select %8, %5, %9 : vector<4x128x128xi1>, vector<4x128x128xf32>
    %cst_10 = arith.constant dense<0xFF800000> : vector<4x128xf32>
    %11 = vector.multi_reduction <maximumf>, %10, %cst_10 [2] : vector<4x128x128xf32> to vector<4x128xf32>
    %12 = vector.shape_cast %11 : vector<4x128xf32> to vector<4x128x1xf32>
    %13 = vector.broadcast %12 : vector<4x128x1xf32> to vector<4x128x128xf32>
    %14 = arith.subf %10, %13 : vector<4x128x128xf32>
    %15 = math.exp %14 : vector<4x128x128xf32>
    %cst_11 = arith.constant dense<0.000000e+00> : vector<4x128xf32>
    %16 = vector.multi_reduction <add>, %15, %cst_11 [2] : vector<4x128x128xf32> to vector<4x128xf32>
    %17 = vector.shape_cast %16 : vector<4x128xf32> to vector<4x128x1xf32>
    %18 = tpu.reciprocal %17 {approx = true} : vector<4x128x1xf32> -> vector<4x128x1xf32>
    %19 = arith.mulf %17, %18 : vector<4x128x1xf32>
    %cst_12 = arith.constant 2.000000e+00 : f32
    %20 = vector.broadcast %cst_12 : f32 to vector<4x128x1xf32>
    %21 = arith.subf %20, %19 : vector<4x128x1xf32>
    %22 = arith.mulf %18, %21 : vector<4x128x1xf32>
    %23 = vector.broadcast %22 : vector<4x128x1xf32> to vector<4x128x128xf32>
    %24 = arith.mulf %15, %23 : vector<4x128x128xf32>
    %cst_13 = arith.constant dense<0.000000e+00> : vector<4x8x128xf32>
    %25 = tpu.matmul %2, %24, %cst_13 {dimension_numbers = #tpu.dot_dimension_numbers<[2], [2], [1], [1], [0, 0, 0, 1, 1, 1], [0], [0]>} : vector<4x8x128xf32>, vector<4x128x128xf32>, vector<4x8x128xf32> -> vector<4x8x128xf32>
    %c0_14 = arith.constant 0 : index
    %c0_15 = arith.constant 0 : index
    %c0_16 = arith.constant 0 : index
    %26 = vector.load %arg4[%c0_14, %c0_15, %c0_16] : memref<4x8x128xf32, #tpu.memory_space<vmem>>, vector<4x8x128xf32>
    tpu.vector_store %arg4[%c0_14, %c0_15, %c0_16], %25 {strides = array<i32>} : memref<4x8x128xf32, #tpu.memory_space<vmem>>, vector<4x8x128xf32>,
    return
  }
  func.func @transform_0(%arg0: i32) -> (i32, i32, i32) {
    %c0_i32 = arith.constant 0 : i32
    %c0_i32_0 = arith.constant 0 : i32
    %c0_i32_1 = arith.constant 0 : i32
    return %arg0, %c0_i32, %c0_i32_0 : i32, i32, i32
  }
  func.func @transform_1(%arg0: i32) -> (i32, i32, i32) {
    %c0_i32 = arith.constant 0 : i32
    %c0_i32_0 = arith.constant 0 : i32
    %c0_i32_1 = arith.constant 0 : i32
    return %arg0, %c0_i32, %c0_i32_0 : i32, i32, i32
  }
  func.func @transform_2(%arg0: i32) -> (i32, i32, i32) {
    %c0_i32 = arith.constant 0 : i32
    %c0_i32_0 = arith.constant 0 : i32
    %c0_i32_1 = arith.constant 0 : i32
    return %arg0, %c0_i32, %c0_i32_0 : i32, i32, i32
  }
  func.func @transform_3(%arg0: i32) -> (i32, i32, i32) {
    %c0_i32 = arith.constant 0 : i32
    %c0_i32_0 = arith.constant 0 : i32
    %c0_i32_1 = arith.constant 0 : i32
    return %arg0, %c0_i32, %c0_i32_0 : i32, i32, i32
  }
}

</mosaic_0001>

<llo_original>
// kernel: qkv_attention_legacy.1
$region0: #{qkv_attention_legacy.1}
  #allocation0 [shape = 'u32[]', space=smem, size = 0x4, offset = 0x4, fixed_abs, tag = 'smem constant byte address 0x4 - core index']
  #allocation1 [shape = 'u32[144,128]{1,0:T(1,128)}', space=vmem, size = 0x12000, scoped, tag = 'internal scratch']
  %s0 = inlined_call_operand.vmem [shape: f32[4,8,128], index: 0, kind: input, shape index: {}]
  %s1 = inlined_call_operand.vmem [shape: f32[4,8,128], index: 1, kind: input, shape index: {}]
  %s2 = inlined_call_operand.vmem [shape: f32[4,8,128], index: 2, kind: input, shape index: {}]
  %s3 = inlined_call_operand.hbm [shape: f32[4,8,128], index: 3, kind: output, shape index: {}]
  %s4 = sld [smem:[#allocation0]]
  $region22: #{qkv_attention_legacy.1} parent=0
    _
  %s6 = ssub.s32 1, %s4
  %s7 = scalar_select 0, %s6, %s4
  $region1: #{qkv_attention_legacy.1} parent=0
    #allocation2 [shape = 'u8[16384]{0}', space=vmem, size = 0x4000, scoped, tag = 'output window, operand 0, single buffered']
    #allocation3 [shape = 's32[1]{0}', space=sflag, size = 0x4, scoped, tag = 'scoped memory for qkv_attention_legacy.1']
    %8 = vsyncpa [#allocation3], 0
    // Predicated region
    $region2: #{qkv_attention_legacy.1} parent=1 // pred_check
      _
    $region3: #{qkv_attention_legacy.1} parent=1 // pred_check_branch
      %10 = sbr.rel (0) target = $region5
    $region4: #{qkv_attention_legacy.1} parent=1 // pred_region
      _
    $region5: #{qkv_attention_legacy.1} parent=1 // pred_fallthru
      _
    // Predicated region
    $region6: #{qkv_attention_legacy.1} parent=1 // pred_check
      _
    $region7: #{qkv_attention_legacy.1} parent=1 // pred_check_branch
      %12 = sbr.rel (0) target = $region9
    $region8: #{qkv_attention_legacy.1} parent=1 // pred_region
      _
    $region9: #{qkv_attention_legacy.1} parent=1 // pred_fallthru
      _
    // Predicated region
    $region10: #{qkv_attention_legacy.1} parent=1 // pred_check
      _
    $region11: #{qkv_attention_legacy.1} parent=1 // pred_check_branch
      %14 = sbr.rel (0) target = $region13
    $region12: #{qkv_attention_legacy.1} parent=1 // pred_region
      _
    $region13: #{qkv_attention_legacy.1} parent=1 // pred_fallthru
      _
    %v15 = vld [vmem:[%s0] sm:$0xff]
    %v16 = vld [vmem:[%s0 + $0x8] sm:$0xff]
    %v17 = vld [vmem:[%s0 + $0x10] sm:$0xff]
    %v18 = vld [vmem:[%s0 + $0x18] sm:$0xff]
    %v19 = vld [vmem:[%s1] sm:$0xff]
    %v20 = vld [vmem:[%s1 + $0x8] sm:$0xff]
    %v21 = vld [vmem:[%s1 + $0x10] sm:$0xff]
    %v22 = vld [vmem:[%s1 + $0x18] sm:$0xff]
    %v23 = vld [vmem:[%s2] sm:$0xff]
    %v24 = vld [vmem:[%s2 + $0x8] sm:$0xff]
    %v25 = vld [vmem:[%s2 + $0x10] sm:$0xff]
    %v26 = vld [vmem:[%s2 + $0x18] sm:$0xff]
    %v27 = vmul.f32 %v15, 0.35355338
    %v28 = vmul.f32 %v16, 0.35355338
    %v29 = vmul.f32 %v17, 0.35355338
    %v30 = vmul.f32 %v18, 0.35355338
    %31 = vxpose.xlu0.b32.start [1/16] %v27, 128
    %32 = vxpose.xlu0.b32.cont [2/16] 0.0, 128
    %33 = vxpose.xlu0.b32.cont [3/16] 0.0, 128
    %34 = vxpose.xlu0.b32.cont [4/16] 0.0, 128
    %35 = vxpose.xlu0.b32.cont [5/16] 0.0, 128
    %36 = vxpose.xlu0.b32.cont [6/16] 0.0, 128
    %37 = vxpose.xlu0.b32.cont [7/16] 0.0, 128
    %38 = vxpose.xlu0.b32.cont [8/16] 0.0, 128
    %39 = vxpose.xlu0.b32.cont [9/16] 0.0, 128
    %40 = vxpose.xlu0.b32.cont [10/16] 0.0, 128
    %41 = vxpose.xlu0.b32.cont [11/16] 0.0, 128
    %42 = vxpose.xlu0.b32.cont [12/16] 0.0, 128
    %43 = vxpose.xlu0.b32.cont [13/16] 0.0, 128
    %44 = vxpose.xlu0.b32.cont [14/16] 0.0, 128
    %45 = vxpose.xlu0.b32.cont [15/16] 0.0, 128
    %46 = vxpose.xlu0.b32.end [16/16] 0.0, 128
    %v47 = vpop.trf.xlu0
    %v48 = vpop.trf.xlu0
    %v49 = vpop.trf.xlu0
    %v50 = vpop.trf.xlu0
    %v51 = vpop.trf.xlu0
    %v52 = vpop.trf.xlu0
    %v53 = vpop.trf.xlu0
    %v54 = vpop.trf.xlu0
    %v55 = vpop.trf.xlu0
    %v56 = vpop.trf.xlu0
    %v57 = vpop.trf.xlu0
    %v58 = vpop.trf.xlu0
    %v59 = vpop.trf.xlu0
    %v60 = vpop.trf.xlu0
    %v61 = vpop.trf.xlu0
    %v62 = vpop.trf.xlu0
    %vm63 = vcmask 64512
    %v65 = vsel %vm63, %v47, 0
    %v68 = vsel %vm63, %v48, 0
    %v71 = vsel %vm63, %v49, 0
    %v74 = vsel %vm63, %v50, 0
    %v77 = vsel %vm63, %v51, 0
    %v80 = vsel %vm63, %v52, 0
    %v83 = vsel %vm63, %v53, 0
    %v86 = vsel %vm63, %v54, 0
    %v89 = vsel %vm63, %v55, 0
    %v92 = vsel %vm63, %v56, 0
    %v95 = vsel %vm63, %v57, 0
    %v98 = vsel %vm63, %v58, 0
    %v101 = vsel %vm63, %v59, 0
    %v104 = vsel %vm63, %v60, 0
    %v107 = vsel %vm63, %v61, 0
    %v110 = vsel %vm63, %v62, 0
    %112 = vmatprep.subr.mxu0 0.0
    %113 = vmatpush1.msra.mxu0 %v19
    %114 = vmatprep.subr.mxu0 0.0
    %115 = vmatpush1.msra.mxu0 0.0
    %116 = vmatprep.subr.mxu0 0.0
    %117 = vmatpush1.msra.mxu0 0.0
    %118 = vmatprep.subr.mxu0 0.0
    %119 = vmatpush1.msra.mxu0 0.0
    %120 = vmatprep.subr.mxu0 0.0
    %121 = vmatpush1.msra.mxu0 0.0
    %122 = vmatprep.subr.mxu0 0.0
    %123 = vmatpush1.msra.mxu0 0.0
    %124 = vmatprep.subr.mxu0 0.0
    %125 = vmatpush1.msra.mxu0 0.0
    %126 = vmatprep.subr.mxu0 0.0
    %127 = vmatpush1.msra.mxu0 0.0
    %128 = vmatprep.subr.mxu0 0.0
    %129 = vmatpush1.msra.mxu0 0.0
    %130 = vmatprep.subr.mxu0 0.0
    %131 = vmatpush1.msra.mxu0 0.0
    %132 = vmatprep.subr.mxu0 0.0
    %133 = vmatpush1.msra.mxu0 0.0
    %134 = vmatprep.subr.mxu0 0.0
    %135 = vmatpush1.msra.mxu0 0.0
    %136 = vmatprep.subr.mxu0 0.0
    %137 = vmatpush1.msra.mxu0 0.0
    %138 = vmatprep.subr.mxu0 0.0
    %139 = vmatpush1.msra.mxu0 0.0
    %140 = vmatprep.subr.mxu0 0.0
    %141 = vmatpush1.msra.mxu0 0.0
    %142 = vmatprep.subr.mxu0 0.0
    %143 = vmatpush1.msra.mxu0 0.0
    %144 = vmatprep.subr.mxu0 0.0
    %145 = vmatpush1.msra.mxu0 0.0
    %146 = vmatprep.subr.mxu0 0.0
    %147 = vmatpush1.msra.mxu0 0.0
    %148 = vmatprep.subr.mxu0 0.0
    %149 = vmatpush1.msra.mxu0 0.0
    %150 = vmatprep.subr.mxu0 0.0
    %151 = vmatpush1.msra.mxu0 0.0
    %152 = vmatprep.subr.mxu0 0.0
    %153 = vmatpush1.msra.mxu0 0.0
    %154 = vmatprep.subr.mxu0 0.0
    %155 = vmatpush1.msra.mxu0 0.0
    %156 = vmatprep.subr.mxu0 0.0
    %157 = vmatpush1.msra.mxu0 0.0
    %158 = vmatprep.subr.mxu0 0.0
    %159 = vmatpush1.msra.mxu0 0.0
    %160 = vmatprep.subr.mxu0 0.0
    %161 = vmatpush1.msra.mxu0 0.0
    %162 = vmatprep.subr.mxu0 0.0
    %163 = vmatpush1.msra.mxu0 0.0
    %164 = vmatprep.subr.mxu0 0.0
    %165 = vmatpush1.msra.mxu0 0.0
    %166 = vmatprep.subr.mxu0 0.0
    %167 = vmatpush1.msra.mxu0 0.0
    %168 = vmatprep.subr.mxu0 0.0
    %169 = vmatpush1.msra.mxu0 0.0
    %170 = vmatprep.subr.mxu0 0.0
    %171 = vmatpush1.msra.mxu0 0.0
    %172 = vmatprep.subr.mxu0 0.0
    %173 = vmatpush1.msra.mxu0 0.0
    %174 = vmatprep.subr.mxu0 0.0
    %175 = vmatpush1.msra.mxu0 0.0
    %176 = vmatprep.mubr.f32.mxu0 0.0
    %177 = vmatmul.mubr.f32.gmra.mrb[0].mxu0 %v65
    %v178 = vpop.f32.mrb[0].mxu0
    %v179 = vadd.f32 0.0, %v178
    %v180 = vpop.f32.mrb[0].mxu0
    %181 = vmatprep.mubr.f32.mxu0 0.0
    %182 = vmatmul.mubr.f32.gmra.mrb[0].mxu0 %v68
    %v183 = vpop.f32.mrb[0].mxu0
    %v184 = vadd.f32 0.0, %v183
    %v185 = vpop.f32.mrb[0].mxu0
    %186 = vmatprep.mubr.f32.mxu0 0.0
    %187 = vmatmul.mubr.f32.gmra.mrb[0].mxu0 %v71
    %v188 = vpop.f32.mrb[0].mxu0
    %v189 = vadd.f32 0.0, %v188
    %v190 = vpop.f32.mrb[0].mxu0
    %191 = vmatprep.mubr.f32.mxu0 0.0
    %192 = vmatmul.mubr.f32.gmra.mrb[0].mxu0 %v74
    %v193 = vpop.f32.mrb[0].mxu0
    %v194 = vadd.f32 0.0, %v193
    %v195 = vpop.f32.mrb[0].mxu0
    %196 = vmatprep.mubr.f32.mxu0 0.0
    %197 = vmatmul.mubr.f32.gmra.mrb[0].mxu0 %v77
    %v198 = vpop.f32.mrb[0].mxu0
    %v199 = vadd.f32 0.0, %v198
    %v200 = vpop.f32.mrb[0].mxu0
    %201 = vmatprep.mubr.f32.mxu0 0.0
    %202 = vmatmul.mubr.f32.gmra.mrb[0].mxu0 %v80
    %v203 = vpop.f32.mrb[0].mxu0
    %v204 = vadd.f32 0.0, %v203
    %v205 = vpop.f32.mrb[0].mxu0
    %206 = vmatprep.mubr.f32.mxu0 0.0
    %207 = vmatmul.mubr.f32.gmra.mrb[0].mxu0 %v83
    %v208 = vpop.f32.mrb[0].mxu0
    %v209 = vadd.f32 0.0, %v208
    %v210 = vpop.f32.mrb[0].mxu0
    %211 = vmatprep.mubr.f32.mxu0 0.0
    %212 = vmatmul.mubr.f32.gmra.mrb[0].mxu0 %v86
    %v213 = vpop.f32.mrb[0].mxu0
    %v214 = vadd.f32 0.0, %v213
    %v215 = vpop.f32.mrb[0].mxu0
    %216 = vmatprep.mubr.f32.mxu0 0.0
    %217 = vmatmul.mubr.f32.gmra.mrb[0].mxu0 %v89
    %v218 = vpop.f32.mrb[0].mxu0
    %v219 = vadd.f32 0.0, %v218
    %v220 = vpop.f32.mrb[0].mxu0
    %221 = vmatprep.mubr.f32.mxu0 0.0
    %222 = vmatmul.mubr.f32.gmra.mrb[0].mxu0 %v92
    %v223 = vpop.f32.mrb[0].mxu0
    %v224 = vadd.f32 0.0, %v223
    %v225 = vpop.f32.mrb[0].mxu0
    %226 = vmatprep.mubr.f32.mxu0 0.0
    %227 = vmatmul.mubr.f32.gmra.mrb[0].mxu0 %v95
    %v228 = vpop.f32.mrb[0].mxu0
    %v229 = vadd.f32 0.0, %v228
    %v230 = vpop.f32.mrb[0].mxu0
    %231 = vmatprep.mubr.f32.mxu0 0.0
    %232 = vmatmul.mubr.f32.gmra.mrb[0].mxu0 %v98
    %v233 = vpop.f32.mrb[0].mxu0
    %v234 = vadd.f32 0.0, %v233
    %v235 = vpop.f32.mrb[0].mxu0
    %236 = vmatprep.mubr.f32.mxu0 0.0
    %237 = vmatmul.mubr.f32.gmra.mrb[0].mxu0 %v101
    %v238 = vpop.f32.mrb[0].mxu0
    %v239 = vadd.f32 0.0, %v238
    %v240 = vpop.f32.mrb[0].mxu0
    %241 = vmatprep.mubr.f32.mxu0 0.0
    %242 = vmatmul.mubr.f32.gmra.mrb[0].mxu0 %v104
    %v243 = vpop.f32.mrb[0].mxu0
    %v244 = vadd.f32 0.0, %v243
    %v245 = vpop.f32.mrb[0].mxu0
    %246 = vmatprep.mubr.f32.mxu0 0.0
    %247 = vmatmul.mubr.f32.gmra.mrb[0].mxu0 %v107
    %v248 = vpop.f32.mrb[0].mxu0
    %v249 = vadd.f32 0.0, %v248
    %v250 = vpop.f32.mrb[0].mxu0
    %251 = vmatprep.mubr.f32.mxu0 0.0
    %252 = vmatmul.mubr.f32.gmra.mrb[0].mxu0 %v110
    %v253 = vpop.f32.mrb[0].mxu0
    %v254 = vadd.f32 0.0, %v253
    %v255 = vpop.f32.mrb[0].mxu0
    %256 = vdwg.mxu0
    %257 = vxpose.xlu0.b32.start [1/16] %v28, 128
    %258 = vxpose.xlu0.b32.cont [2/16] 0.0, 128
    %259 = vxpose.xlu0.b32.cont [3/16] 0.0, 128
    %260 = vxpose.xlu0.b32.cont [4/16] 0.0, 128
    %261 = vxpose.xlu0.b32.cont [5/16] 0.0, 128
    %262 = vxpose.xlu0.b32.cont [6/16] 0.0, 128
    %263 = vxpose.xlu0.b32.cont [7/16] 0.0, 128
    %264 = vxpose.xlu0.b32.cont [8/16] 0.0, 128
    %265 = vxpose.xlu0.b32.cont [9/16] 0.0, 128
    %266 = vxpose.xlu0.b32.cont [10/16] 0.0, 128
    %267 = vxpose.xlu0.b32.cont [11/16] 0.0, 128
    %268 = vxpose.xlu0.b32.cont [12/16] 0.0, 128
    %269 = vxpose.xlu0.b32.cont [13/16] 0.0, 128
    %270 = vxpose.xlu0.b32.cont [14/16] 0.0, 128
    %271 = vxpose.xlu0.b32.cont [15/16] 0.0, 128
    %272 = vxpose.xlu0.b32.end [16/16] 0.0, 128
    %v273 = vpop.trf.xlu0
    %v274 = vpop.trf.xlu0
    %v275 = vpop.trf.xlu0
    %v276 = vpop.trf.xlu0
    %v277 = vpop.trf.xlu0
    %v278 = vpop.trf.xlu0
    %v279 = vpop.trf.xlu0
    %v280 = vpop.trf.xlu0
    %v281 = vpop.trf.xlu0
    %v282 = vpop.trf.xlu0
    %v283 = vpop.trf.xlu0
    %v284 = vpop.trf.xlu0
    %v285 = vpop.trf.xlu0
    %v286 = vpop.trf.xlu0
    %v287 = vpop.trf.xlu0
    %v288 = vpop.trf.xlu0
    %v290 = vsel %vm63, %v273, 0
    %v293 = vsel %vm63, %v274, 0
    %v296 = vsel %vm63, %v275, 0
    %v299 = vsel %vm63, %v276, 0
    %v302 = vsel %vm63, %v277, 0
    %v305 = vsel %vm63, %v278, 0
    %v308 = vsel %vm63, %v279, 0
    %v311 = vsel %vm63, %v280, 0
    %v314 = vsel %vm63, %v281, 0
    %v317 = vsel %vm63, %v282, 0
    %v320 = vsel %vm63, %v283, 0
    %v323 = vsel %vm63, %v284, 0
    %v326 = vsel %vm63, %v285, 0
    %v329 = vsel %vm63, %v286, 0
    %v332 = vsel %vm63, %v287, 0
    %v335 = vsel %vm63, %v288, 0
    %337 = vmatprep.subr.mxu0 0.0
    %338 = vmatpush1.msra.mxu0 %v20
    %339 = vmatprep.subr.mxu0 0.0
    %340 = vmatpush1.msra.mxu0 0.0
    %341 = vmatprep.subr.mxu0 0.0
    %342 = vmatpush1.msra.mxu0 0.0
    %343 = vmatprep.subr.mxu0 0.0
    %344 = vmatpush1.msra.mxu0 0.0
    %345 = vmatprep.subr.mxu0 0.0
    %346 = vmatpush1.msra.mxu0 0.0
    %347 = vmatprep.subr.mxu0 0.0
    %348 = vmatpush1.msra.mxu0 0.0
    %349 = vmatprep.subr.mxu0 0.0
    %350 = vmatpush1.msra.mxu0 0.0
    %351 = vmatprep.subr.mxu0 0.0
    %352 = vmatpush1.msra.mxu0 0.0
    %353 = vmatprep.subr.mxu0 0.0
    %354 = vmatpush1.msra.mxu0 0.0
    %355 = vmatprep.subr.mxu0 0.0
    %356 = vmatpush1.msra.mxu0 0.0
    %357 = vmatprep.subr.mxu0 0.0
    %358 = vmatpush1.msra.mxu0 0.0
    %359 = vmatprep.subr.mxu0 0.0
    %360 = vmatpush1.msra.mxu0 0.0
    %361 = vmatprep.subr.mxu0 0.0
    %362 = vmatpush1.msra.mxu0 0.0
    %363 = vmatprep.subr.mxu0 0.0
    %364 = vmatpush1.msra.mxu0 0.0
    %365 = vmatprep.subr.mxu0 0.0
    %366 = vmatpush1.msra.mxu0 0.0
    %367 = vmatprep.subr.mxu0 0.0
    %368 = vmatpush1.msra.mxu0 0.0
    %369 = vmatprep.subr.mxu0 0.0
    %370 = vmatpush1.msra.mxu0 0.0
    %371 = vmatprep.subr.mxu0 0.0
    %372 = vmatpush1.msra.mxu0 0.0
    %373 = vmatprep.subr.mxu0 0.0
    %374 = vmatpush1.msra.mxu0 0.0
    %375 = vmatprep.subr.mxu0 0.0
    %376 = vmatpush1.msra.mxu0 0.0
    %377 = vmatprep.subr.mxu0 0.0
    %378 = vmatpush1.msra.mxu0 0.0
    %379 = vmatprep.subr.mxu0 0.0
    %380 = vmatpush1.msra.mxu0 0.0
    %381 = vmatprep.subr.mxu0 0.0
    %382 = vmatpush1.msra.mxu0 0.0
    %383 = vmatprep.subr.mxu0 0.0
    %384 = vmatpush1.msra.mxu0 0.0
    %385 = vmatprep.subr.mxu0 0.0
    %386 = vmatpush1.msra.mxu0 0.0
    %387 = vmatprep.subr.mxu0 0.0
    %388 = vmatpush1.msra.mxu0 0.0
    %389 = vmatprep.subr.mxu0 0.0
    %390 = vmatpush1.msra.mxu0 0.0
    %391 = vmatprep.subr.mxu0 0.0
    %392 = vmatpush1.msra.mxu0 0.0
    %393 = vmatprep.subr.mxu0 0.0
    %394 = vmatpush1.msra.mxu0 0.0
    %395 = vmatprep.subr.mxu0 0.0
    %396 = vmatpush1.msra.mxu0 0.0
    %397 = vmatprep.subr.mxu0 0.0
    %398 = vmatpush1.msra.mxu0 0.0
    %399 = vmatprep.subr.mxu0 0.0
    %400 = vmatpush1.msra.mxu0 0.0
    %401 = vmatprep.mubr.f32.mxu0 0.0
    %402 = vmatmul.mubr.f32.gmra.mrb[0].mxu0 %v290
    %v403 = vpop.f32.mrb[0].mxu0
    %v404 = vadd.f32 0.0, %v403
    %v405 = vpop.f32.mrb[0].mxu0
    %406 = vmatprep.mubr.f32.mxu0 0.0
    %407 = vmatmul.mubr.f32.gmra.mrb[0].mxu0 %v293
    %v408 = vpop.f32.mrb[0].mxu0
    %v409 = vadd.f32 0.0, %v408
    %v410 = vpop.f32.mrb[0].mxu0
    %411 = vmatprep.mubr.f32.mxu0 0.0
    %412 = vmatmul.mubr.f32.gmra.mrb[0].mxu0 %v296
    %v413 = vpop.f32.mrb[0].mxu0
    %v414 = vadd.f32 0.0, %v413
    %v415 = vpop.f32.mrb[0].mxu0
    %416 = vmatprep.mubr.f32.mxu0 0.0
    %417 = vmatmul.mubr.f32.gmra.mrb[0].mxu0 %v299
    %v418 = vpop.f32.mrb[0].mxu0
    %v419 = vadd.f32 0.0, %v418
    %v420 = vpop.f32.mrb[0].mxu0
    %421 = vmatprep.mubr.f32.mxu0 0.0
    %422 = vmatmul.mubr.f32.gmra.mrb[0].mxu0 %v302
    %v423 = vpop.f32.mrb[0].mxu0
    %v424 = vadd.f32 0.0, %v423
    %v425 = vpop.f32.mrb[0].mxu0
    %426 = vmatprep.mubr.f32.mxu0 0.0
    %427 = vmatmul.mubr.f32.gmra.mrb[0].mxu0 %v305
    %v428 = vpop.f32.mrb[0].mxu0
    %v429 = vadd.f32 0.0, %v428
    %v430 = vpop.f32.mrb[0].mxu0
    %431 = vmatprep.mubr.f32.mxu0 0.0
    %432 = vmatmul.mubr.f32.gmra.mrb[0].mxu0 %v308
    %v433 = vpop.f32.mrb[0].mxu0
    %v434 = vadd.f32 0.0, %v433
    %v435 = vpop.f32.mrb[0].mxu0
    %436 = vmatprep.mubr.f32.mxu0 0.0
    %437 = vmatmul.mubr.f32.gmra.mrb[0].mxu0 %v311
    %v438 = vpop.f32.mrb[0].mxu0
    %v439 = vadd.f32 0.0, %v438
    %v440 = vpop.f32.mrb[0].mxu0
    %441 = vmatprep.mubr.f32.mxu0 0.0
    %442 = vmatmul.mubr.f32.gmra.mrb[0].mxu0 %v314
    %v443 = vpop.f32.mrb[0].mxu0
    %v444 = vadd.f32 0.0, %v443
    %v445 = vpop.f32.mrb[0].mxu0
    %446 = vmatprep.mubr.f32.mxu0 0.0
    %447 = vmatmul.mubr.f32.gmra.mrb[0].mxu0 %v317
    %v448 = vpop.f32.mrb[0].mxu0
    %v449 = vadd.f32 0.0, %v448
    %v450 = vpop.f32.mrb[0].mxu0
    %451 = vmatprep.mubr.f32.mxu0 0.0
    %452 = vmatmul.mubr.f32.gmra.mrb[0].mxu0 %v320
    %v453 = vpop.f32.mrb[0].mxu0
    %v454 = vadd.f32 0.0, %v453
    %v455 = vpop.f32.mrb[0].mxu0
    %456 = vmatprep.mubr.f32.mxu0 0.0
    %457 = vmatmul.mubr.f32.gmra.mrb[0].mxu0 %v323
    %v458 = vpop.f32.mrb[0].mxu0
    %v459 = vadd.f32 0.0, %v458
    %v460 = vpop.f32.mrb[0].mxu0
    %461 = vmatprep.mubr.f32.mxu0 0.0
    %462 = vmatmul.mubr.f32.gmra.mrb[0].mxu0 %v326
    %v463 = vpop.f32.mrb[0].mxu0
    %v464 = vadd.f32 0.0, %v463
    %v465 = vpop.f32.mrb[0].mxu0
    %466 = vmatprep.mubr.f32.mxu0 0.0
    %467 = vmatmul.mubr.f32.gmra.mrb[0].mxu0 %v329
    %v468 = vpop.f32.mrb[0].mxu0
    %v469 = vadd.f32 0.0, %v468
    %v470 = vpop.f32.mrb[0].mxu0
    %471 = vmatprep.mubr.f32.mxu0 0.0
    %472 = vmatmul.mubr.f32.gmra.mrb[0].mxu0 %v332
    %v473 = vpop.f32.mrb[0].mxu0
    %v474 = vadd.f32 0.0, %v473
    %v475 = vpop.f32.mrb[0].mxu0
    %476 = vmatprep.mubr.f32.mxu0 0.0
    %477 = vmatmul.mubr.f32.gmra.mrb[0].mxu0 %v335
    %v478 = vpop.f32.mrb[0].mxu0
    %v479 = vadd.f32 0.0, %v478
    %v480 = vpop.f32.mrb[0].mxu0
    %481 = vdwg.mxu0
    %482 = vxpose.xlu0.b32.start [1/16] %v29, 128
    %483 = vxpose.xlu0.b32.cont [2/16] 0.0, 128
    %484 = vxpose.xlu0.b32.cont [3/16] 0.0, 128
    %485 = vxpose.xlu0.b32.cont [4/16] 0.0, 128
    %486 = vxpose.xlu0.b32.cont [5/16] 0.0, 128
    %487 = vxpose.xlu0.b32.cont [6/16] 0.0, 128
    %488 = vxpose.xlu0.b32.cont [7/16] 0.0, 128
    %489 = vxpose.xlu0.b32.cont [8/16] 0.0, 128
    %490 = vxpose.xlu0.b32.cont [9/16] 0.0, 128
    %491 = vxpose.xlu0.b32.cont [10/16] 0.0, 128
    %492 = vxpose.xlu0.b32.cont [11/16] 0.0, 128
    %493 = vxpose.xlu0.b32.cont [12/16] 0.0, 128
    %494 = vxpose.xlu0.b32.cont [13/16] 0.0, 128
    %495 = vxpose.xlu0.b32.cont [14/16] 0.0, 128
    %496 = vxpose.xlu0.b32.cont [15/16] 0.0, 128
    %497 = vxpose.xlu0.b32.end [16/16] 0.0, 128
    %v498 = vpop.trf.xlu0
    %v499 = vpop.trf.xlu0
    %v500 = vpop.trf.xlu0
    %v501 = vpop.trf.xlu0
    %v502 = vpop.trf.xlu0
    %v503 = vpop.trf.xlu0
    %v504 = vpop.trf.xlu0
    %v505 = vpop.trf.xlu0
    %v506 = vpop.trf.xlu0
    %v507 = vpop.trf.xlu0
    %v508 = vpop.trf.xlu0
    %v509 = vpop.trf.xlu0
    %v510 = vpop.trf.xlu0
    %v511 = vpop.trf.xlu0
    %v512 = vpop.trf.xlu0
    %v513 = vpop.trf.xlu0
    %v515 = vsel %vm63, %v498, 0
    %v518 = vsel %vm63, %v499, 0
    %v521 = vsel %vm63, %v500, 0
    %v524 = vsel %vm63, %v501, 0
    %v527 = vsel %vm63, %v502, 0
    %v530 = vsel %vm63, %v503, 0
    %v533 = vsel %vm63, %v504, 0
    %v536 = vsel %vm63, %v505, 0
    %v539 = vsel %vm63, %v506, 0
    %v542 = vsel %vm63, %v507, 0
    %v545 = vsel %vm63, %v508, 0
    %v548 = vsel %vm63, %v509, 0
    %v551 = vsel %vm63, %v510, 0
    %v554 = vsel %vm63, %v511, 0
    %v557 = vsel %vm63, %v512, 0
    %v560 = vsel %vm63, %v513, 0
    %562 = vmatprep.subr.mxu0 0.0
    %563 = vmatpush1.msra.mxu0 %v21
    %564 = vmatprep.subr.mxu0 0.0
    %565 = vmatpush1.msra.mxu0 0.0
    %566 = vmatprep.subr.mxu0 0.0
    %567 = vmatpush1.msra.mxu0 0.0
    %568 = vmatprep.subr.mxu0 0.0
    %569 = vmatpush1.msra.mxu0 0.0
    %570 = vmatprep.subr.mxu0 0.0
    %571 = vmatpush1.msra.mxu0 0.0
    %572 = vmatprep.subr.mxu0 0.0
    %573 = vmatpush1.msra.mxu0 0.0
    %574 = vmatprep.subr.mxu0 0.0
    %575 = vmatpush1.msra.mxu0 0.0
    %576 = vmatprep.subr.mxu0 0.0
    %577 = vmatpush1.msra.mxu0 0.0
    %578 = vmatprep.subr.mxu0 0.0
    %579 = vmatpush1.msra.mxu0 0.0
    %580 = vmatprep.subr.mxu0 0.0
    %581 = vmatpush1.msra.mxu0 0.0
    %582 = vmatprep.subr.mxu0 0.0
    %583 = vmatpush1.msra.mxu0 0.0
    %584 = vmatprep.subr.mxu0 0.0
    %585 = vmatpush1.msra.mxu0 0.0
    %586 = vmatprep.subr.mxu0 0.0
    %587 = vmatpush1.msra.mxu0 0.0
    %588 = vmatprep.subr.mxu0 0.0
    %589 = vmatpush1.msra.mxu0 0.0
    %590 = vmatprep.subr.mxu0 0.0
    %591 = vmatpush1.msra.mxu0 0.0
    %592 = vmatprep.subr.mxu0 0.0
    %593 = vmatpush1.msra.mxu0 0.0
    %594 = vmatprep.subr.mxu0 0.0
    %595 = vmatpush1.msra.mxu0 0.0
    %596 = vmatprep.subr.mxu0 0.0
    %597 = vmatpush1.msra.mxu0 0.0
    %598 = vmatprep.subr.mxu0 0.0
    %599 = vmatpush1.msra.mxu0 0.0
    %600 = vmatprep.subr.mxu0 0.0
    %601 = vmatpush1.msra.mxu0 0.0
    %602 = vmatprep.subr.mxu0 0.0
    %603 = vmatpush1.msra.mxu0 0.0
    %604 = vmatprep.subr.mxu0 0.0
    %605 = vmatpush1.msra.mxu0 0.0
    %606 = vmatprep.subr.mxu0 0.0
    %607 = vmatpush1.msra.mxu0 0.0
    %608 = vmatprep.subr.mxu0 0.0
    %609 = vmatpush1.msra.mxu0 0.0
    %610 = vmatprep.subr.mxu0 0.0
    %611 = vmatpush1.msra.mxu0 0.0
    %612 = vmatprep.subr.mxu0 0.0
    %613 = vmatpush1.msra.mxu0 0.0
    %614 = vmatprep.subr.mxu0 0.0
    %615 = vmatpush1.msra.mxu0 0.0
    %616 = vmatprep.subr.mxu0 0.0
    %617 = vmatpush1.msra.mxu0 0.0
    %618 = vmatprep.subr.mxu0 0.0
    %619 = vmatpush1.msra.mxu0 0.0
    %620 = vmatprep.subr.mxu0 0.0
    %621 = vmatpush1.msra.mxu0 0.0
    %622 = vmatprep.subr.mxu0 0.0
    %623 = vmatpush1.msra.mxu0 0.0
    %624 = vmatprep.subr.mxu0 0.0
    %625 = vmatpush1.msra.mxu0 0.0
    %626 = vmatprep.mubr.f32.mxu0 0.0
    %627 = vmatmul.mubr.f32.gmra.mrb[0].mxu0 %v515
    %v628 = vpop.f32.mrb[0].mxu0
    %v629 = vadd.f32 0.0, %v628
    %v630 = vpop.f32.mrb[0].mxu0
    %631 = vmatprep.mubr.f32.mxu0 0.0
    %632 = vmatmul.mubr.f32.gmra.mrb[0].mxu0 %v518
    %v633 = vpop.f32.mrb[0].mxu0
    %v634 = vadd.f32 0.0, %v633
    %v635 = vpop.f32.mrb[0].mxu0
    %636 = vmatprep.mubr.f32.mxu0 0.0
    %637 = vmatmul.mubr.f32.gmra.mrb[0].mxu0 %v521
    %v638 = vpop.f32.mrb[0].mxu0
    %v639 = vadd.f32 0.0, %v638
    %v640 = vpop.f32.mrb[0].mxu0
    %641 = vmatprep.mubr.f32.mxu0 0.0
    %642 = vmatmul.mubr.f32.gmra.mrb[0].mxu0 %v524
    %v643 = vpop.f32.mrb[0].mxu0
    %v644 = vadd.f32 0.0, %v643
    %v645 = vpop.f32.mrb[0].mxu0
    %646 = vmatprep.mubr.f32.mxu0 0.0
    %647 = vmatmul.mubr.f32.gmra.mrb[0].mxu0 %v527
    %v648 = vpop.f32.mrb[0].mxu0
    %v649 = vadd.f32 0.0, %v648
    %v650 = vpop.f32.mrb[0].mxu0
    %651 = vmatprep.mubr.f32.mxu0 0.0
    %652 = vmatmul.mubr.f32.gmra.mrb[0].mxu0 %v530
    %v653 = vpop.f32.mrb[0].mxu0
    %v654 = vadd.f32 0.0, %v653
    %v655 = vpop.f32.mrb[0].mxu0
    %656 = vmatprep.mubr.f32.mxu0 0.0
    %657 = vmatmul.mubr.f32.gmra.mrb[0].mxu0 %v533
    %v658 = vpop.f32.mrb[0].mxu0
    %v659 = vadd.f32 0.0, %v658
    %v660 = vpop.f32.mrb[0].mxu0
    %661 = vmatprep.mubr.f32.mxu0 0.0
    %662 = vmatmul.mubr.f32.gmra.mrb[0].mxu0 %v536
    %v663 = vpop.f32.mrb[0].mxu0
    %v664 = vadd.f32 0.0, %v663
    %v665 = vpop.f32.mrb[0].mxu0
    %666 = vmatprep.mubr.f32.mxu0 0.0
    %667 = vmatmul.mubr.f32.gmra.mrb[0].mxu0 %v539
    %v668 = vpop.f32.mrb[0].mxu0
    %v669 = vadd.f32 0.0, %v668
    %v670 = vpop.f32.mrb[0].mxu0
    %671 = vmatprep.mubr.f32.mxu0 0.0
    %672 = vmatmul.mubr.f32.gmra.mrb[0].mxu0 %v542
    %v673 = vpop.f32.mrb[0].mxu0
    %v674 = vadd.f32 0.0, %v673
    %v675 = vpop.f32.mrb[0].mxu0
    %676 = vmatprep.mubr.f32.mxu0 0.0
    %677 = vmatmul.mubr.f32.gmra.mrb[0].mxu0 %v545
    %v678 = vpop.f32.mrb[0].mxu0
    %v679 = vadd.f32 0.0, %v678
    %v680 = vpop.f32.mrb[0].mxu0
    %681 = vmatprep.mubr.f32.mxu0 0.0
    %682 = vmatmul.mubr.f32.gmra.mrb[0].mxu0 %v548
    %v683 = vpop.f32.mrb[0].mxu0
    %v684 = vadd.f32 0.0, %v683
    %v685 = vpop.f32.mrb[0].mxu0
    %686 = vmatprep.mubr.f32.mxu0 0.0
    %687 = vmatmul.mubr.f32.gmra.mrb[0].mxu0 %v551
    %v688 = vpop.f32.mrb[0].mxu0
    %v689 = vadd.f32 0.0, %v688
    %v690 = vpop.f32.mrb[0].mxu0
    %691 = vmatprep.mubr.f32.mxu0 0.0
    %692 = vmatmul.mubr.f32.gmra.mrb[0].mxu0 %v554
    %v693 = vpop.f32.mrb[0].mxu0
    %v694 = vadd.f32 0.0, %v693
    %v695 = vpop.f32.mrb[0].mxu0
    %696 = vmatprep.mubr.f32.mxu0 0.0
    %697 = vmatmul.mubr.f32.gmra.mrb[0].mxu0 %v557
    %v698 = vpop.f32.mrb[0].mxu0
    %v699 = vadd.f32 0.0, %v698
    %v700 = vpop.f32.mrb[0].mxu0
    %701 = vmatprep.mubr.f32.mxu0 0.0
    %702 = vmatmul.mubr.f32.gmra.mrb[0].mxu0 %v560
    %v703 = vpop.f32.mrb[0].mxu0
    %v704 = vadd.f32 0.0, %v703
    %v705 = vpop.f32.mrb[0].mxu0
    %706 = vdwg.mxu0
    %707 = vxpose.xlu0.b32.start [1/16] %v30, 128
    %708 = vxpose.xlu0.b32.cont [2/16] 0.0, 128
    %709 = vxpose.xlu0.b32.cont [3/16] 0.0, 128
    %710 = vxpose.xlu0.b32.cont [4/16] 0.0, 128
    %711 = vxpose.xlu0.b32.cont [5/16] 0.0, 128
    %712 = vxpose.xlu0.b32.cont [6/16] 0.0, 128
    %713 = vxpose.xlu0.b32.cont [7/16] 0.0, 128
    %714 = vxpose.xlu0.b32.cont [8/16] 0.0, 128
    %715 = vxpose.xlu0.b32.cont [9/16] 0.0, 128
    %716 = vxpose.xlu0.b32.cont [10/16] 0.0, 128
    %717 = vxpose.xlu0.b32.cont [11/16] 0.0, 128
    %718 = vxpose.xlu0.b32.cont [12/16] 0.0, 128
    %719 = vxpose.xlu0.b32.cont [13/16] 0.0, 128
    %720 = vxpose.xlu0.b32.cont [14/16] 0.0, 128
    %721 = vxpose.xlu0.b32.cont [15/16] 0.0, 128
    %722 = vxpose.xlu0.b32.end [16/16] 0.0, 128
    %v723 = vpop.trf.xlu0
    %v724 = vpop.trf.xlu0
    %v725 = vpop.trf.xlu0
    %v726 = vpop.trf.xlu0
    %v727 = vpop.trf.xlu0
    %v728 = vpop.trf.xlu0
    %v729 = vpop.trf.xlu0
    %v730 = vpop.trf.xlu0
    %v731 = vpop.trf.xlu0
    %v732 = vpop.trf.xlu0
    %v733 = vpop.trf.xlu0
    %v734 = vpop.trf.xlu0
    %v735 = vpop.trf.xlu0
    %v736 = vpop.trf.xlu0
    %v737 = vpop.trf.xlu0
    %v738 = vpop.trf.xlu0
    %v740 = vsel %vm63, %v723, 0
    %v743 = vsel %vm63, %v724, 0
    %v746 = vsel %vm63, %v725, 0
    %v749 = vsel %vm63, %v726, 0
    %v752 = vsel %vm63, %v727, 0
    %v755 = vsel %vm63, %v728, 0
    %v758 = vsel %vm63, %v729, 0
    %v761 = vsel %vm63, %v730, 0
    %v764 = vsel %vm63, %v731, 0
    %v767 = vsel %vm63, %v732, 0
    %v770 = vsel %vm63, %v733, 0
    %v773 = vsel %vm63, %v734, 0
    %v776 = vsel %vm63, %v735, 0
    %v779 = vsel %vm63, %v736, 0
    %v782 = vsel %vm63, %v737, 0
    %v785 = vsel %vm63, %v738, 0
    %787 = vmatprep.subr.mxu0 0.0
    %788 = vmatpush1.msra.mxu0 %v22
    %789 = vmatprep.subr.mxu0 0.0
    %790 = vmatpush1.msra.mxu0 0.0
    %791 = vmatprep.subr.mxu0 0.0
    %792 = vmatpush1.msra.mxu0 0.0
    %793 = vmatprep.subr.mxu0 0.0
    %794 = vmatpush1.msra.mxu0 0.0
    %795 = vmatprep.subr.mxu0 0.0
    %796 = vmatpush1.msra.mxu0 0.0
    %797 = vmatprep.subr.mxu0 0.0
    %798 = vmatpush1.msra.mxu0 0.0
    %799 = vmatprep.subr.mxu0 0.0
    %800 = vmatpush1.msra.mxu0 0.0
    %801 = vmatprep.subr.mxu0 0.0
    %802 = vmatpush1.msra.mxu0 0.0
    %803 = vmatprep.subr.mxu0 0.0
    %804 = vmatpush1.msra.mxu0 0.0
    %805 = vmatprep.subr.mxu0 0.0
    %806 = vmatpush1.msra.mxu0 0.0
    %807 = vmatprep.subr.mxu0 0.0
    %808 = vmatpush1.msra.mxu0 0.0
    %809 = vmatprep.subr.mxu0 0.0
    %810 = vmatpush1.msra.mxu0 0.0
    %811 = vmatprep.subr.mxu0 0.0
    %812 = vmatpush1.msra.mxu0 0.0
    %813 = vmatprep.subr.mxu0 0.0
    %814 = vmatpush1.msra.mxu0 0.0
    %815 = vmatprep.subr.mxu0 0.0
    %816 = vmatpush1.msra.mxu0 0.0
    %817 = vmatprep.subr.mxu0 0.0
    %818 = vmatpush1.msra.mxu0 0.0
    %819 = vmatprep.subr.mxu0 0.0
    %820 = vmatpush1.msra.mxu0 0.0
    %821 = vmatprep.subr.mxu0 0.0
    %822 = vmatpush1.msra.mxu0 0.0
    %823 = vmatprep.subr.mxu0 0.0
    %824 = vmatpush1.msra.mxu0 0.0
    %825 = vmatprep.subr.mxu0 0.0
    %826 = vmatpush1.msra.mxu0 0.0
    %827 = vmatprep.subr.mxu0 0.0
    %828 = vmatpush1.msra.mxu0 0.0
    %829 = vmatprep.subr.mxu0 0.0
    %830 = vmatpush1.msra.mxu0 0.0
    %831 = vmatprep.subr.mxu0 0.0
    %832 = vmatpush1.msra.mxu0 0.0
    %833 = vmatprep.subr.mxu0 0.0
    %834 = vmatpush1.msra.mxu0 0.0
    %835 = vmatprep.subr.mxu0 0.0
    %836 = vmatpush1.msra.mxu0 0.0
    %837 = vmatprep.subr.mxu0 0.0
    %838 = vmatpush1.msra.mxu0 0.0
    %839 = vmatprep.subr.mxu0 0.0
    %840 = vmatpush1.msra.mxu0 0.0
    %841 = vmatprep.subr.mxu0 0.0
    %842 = vmatpush1.msra.mxu0 0.0
    %843 = vmatprep.subr.mxu0 0.0
    %844 = vmatpush1.msra.mxu0 0.0
    %845 = vmatprep.subr.mxu0 0.0
    %846 = vmatpush1.msra.mxu0 0.0
    %847 = vmatprep.subr.mxu0 0.0
    %848 = vmatpush1.msra.mxu0 0.0
    %849 = vmatprep.subr.mxu0 0.0
    %850 = vmatpush1.msra.mxu0 0.0
    %851 = vmatprep.mubr.f32.mxu0 0.0
    %852 = vmatmul.mubr.f32.gmra.mrb[0].mxu0 %v740
    %v853 = vpop.f32.mrb[0].mxu0
    %v854 = vadd.f32 0.0, %v853
    %v855 = vpop.f32.mrb[0].mxu0
    %856 = vmatprep.mubr.f32.mxu0 0.0
    %857 = vmatmul.mubr.f32.gmra.mrb[0].mxu0 %v743
    %v858 = vpop.f32.mrb[0].mxu0
    %v859 = vadd.f32 0.0, %v858
    %v860 = vpop.f32.mrb[0].mxu0
    %861 = vmatprep.mubr.f32.mxu0 0.0
    %862 = vmatmul.mubr.f32.gmra.mrb[0].mxu0 %v746
    %v863 = vpop.f32.mrb[0].mxu0
    %v864 = vadd.f32 0.0, %v863
    %v865 = vpop.f32.mrb[0].mxu0
    %866 = vmatprep.mubr.f32.mxu0 0.0
    %867 = vmatmul.mubr.f32.gmra.mrb[0].mxu0 %v749
    %v868 = vpop.f32.mrb[0].mxu0
    %v869 = vadd.f32 0.0, %v868
    %v870 = vpop.f32.mrb[0].mxu0
    %871 = vmatprep.mubr.f32.mxu0 0.0
    %872 = vmatmul.mubr.f32.gmra.mrb[0].mxu0 %v752
    %v873 = vpop.f32.mrb[0].mxu0
    %v874 = vadd.f32 0.0, %v873
    %v875 = vpop.f32.mrb[0].mxu0
    %876 = vmatprep.mubr.f32.mxu0 0.0
    %877 = vmatmul.mubr.f32.gmra.mrb[0].mxu0 %v755
    %v878 = vpop.f32.mrb[0].mxu0
    %v879 = vadd.f32 0.0, %v878
    %v880 = vpop.f32.mrb[0].mxu0
    %881 = vmatprep.mubr.f32.mxu0 0.0
    %882 = vmatmul.mubr.f32.gmra.mrb[0].mxu0 %v758
    %v883 = vpop.f32.mrb[0].mxu0
    %v884 = vadd.f32 0.0, %v883
    %v885 = vpop.f32.mrb[0].mxu0
    %886 = vmatprep.mubr.f32.mxu0 0.0
    %887 = vmatmul.mubr.f32.gmra.mrb[0].mxu0 %v761
    %v888 = vpop.f32.mrb[0].mxu0
    %v889 = vadd.f32 0.0, %v888
    %v890 = vpop.f32.mrb[0].mxu0
    %891 = vmatprep.mubr.f32.mxu0 0.0
    %892 = vmatmul.mubr.f32.gmra.mrb[0].mxu0 %v764
    %v893 = vpop.f32.mrb[0].mxu0
    %v894 = vadd.f32 0.0, %v893
    %v895 = vpop.f32.mrb[0].mxu0
    %896 = vmatprep.mubr.f32.mxu0 0.0
    %897 = vmatmul.mubr.f32.gmra.mrb[0].mxu0 %v767
    %v898 = vpop.f32.mrb[0].mxu0
    %v899 = vadd.f32 0.0, %v898
    %v900 = vpop.f32.mrb[0].mxu0
    %901 = vmatprep.mubr.f32.mxu0 0.0
    %902 = vmatmul.mubr.f32.gmra.mrb[0].mxu0 %v770
    %v903 = vpop.f32.mrb[0].mxu0
    %v904 = vadd.f32 0.0, %v903
    %v905 = vpop.f32.mrb[0].mxu0
    %906 = vmatprep.mubr.f32.mxu0 0.0
    %907 = vmatmul.mubr.f32.gmra.mrb[0].mxu0 %v773
    %v908 = vpop.f32.mrb[0].mxu0
    %v909 = vadd.f32 0.0, %v908
    %v910 = vpop.f32.mrb[0].mxu0
    %911 = vmatprep.mubr.f32.mxu0 0.0
    %912 = vmatmul.mubr.f32.gmra.mrb[0].mxu0 %v776
    %v913 = vpop.f32.mrb[0].mxu0
    %v914 = vadd.f32 0.0, %v913
    %v915 = vpop.f32.mrb[0].mxu0
    %916 = vmatprep.mubr.f32.mxu0 0.0
    %917 = vmatmul.mubr.f32.gmra.mrb[0].mxu0 %v779
    %v918 = vpop.f32.mrb[0].mxu0
    %v919 = vadd.f32 0.0, %v918
    %v920 = vpop.f32.mrb[0].mxu0
    %921 = vmatprep.mubr.f32.mxu0 0.0
    %922 = vmatmul.mubr.f32.gmra.mrb[0].mxu0 %v782
    %v923 = vpop.f32.mrb[0].mxu0
    %v924 = vadd.f32 0.0, %v923
    %v925 = vpop.f32.mrb[0].mxu0
    %926 = vmatprep.mubr.f32.mxu0 0.0
    %927 = vmatmul.mubr.f32.gmra.mrb[0].mxu0 %v785
    %v928 = vpop.f32.mrb[0].mxu0
    %v929 = vadd.f32 0.0, %v928
    %v930 = vpop.f32.mrb[0].mxu0
    %931 = vdwg.mxu0
    %v932 = vlaneseq
    %v933 = vand.u32 %v932, 127
    %vm934 = vcmp.lt.s32.totalorder %v933, 16
    %v935 = vsel %vm934, %v179, -1e+30
    %v936 = vsel %vm934, %v184, -1e+30
    %v937 = vsel %vm934, %v189, -1e+30
    %v938 = vsel %vm934, %v194, -1e+30
    %v939 = vsel %vm934, %v199, -1e+30
    %v940 = vsel %vm934, %v204, -1e+30
    %v941 = vsel %vm934, %v209, -1e+30
    %v942 = vsel %vm934, %v214, -1e+30
    %v943 = vsel %vm934, %v219, -1e+30
    %v944 = vsel %vm934, %v224, -1e+30
    %v945 = vsel %vm934, %v229, -1e+30
    %v946 = vsel %vm934, %v234, -1e+30
    %v947 = vsel %vm934, %v239, -1e+30
    %v948 = vsel %vm934, %v244, -1e+30
    %v949 = vsel %vm934, %v249, -1e+30
    %v950 = vsel %vm934, %v254, -1e+30
    %v951 = vsel %vm934, %v404, -1e+30
    %v952 = vsel %vm934, %v409, -1e+30
    %v953 = vsel %vm934, %v414, -1e+30
    %v954 = vsel %vm934, %v419, -1e+30
    %v955 = vsel %vm934, %v424, -1e+30
    %v956 = vsel %vm934, %v429, -1e+30
    %v957 = vsel %vm934, %v434, -1e+30
    %v958 = vsel %vm934, %v439, -1e+30
    %v959 = vsel %vm934, %v444, -1e+30
    %v960 = vsel %vm934, %v449, -1e+30
    %v961 = vsel %vm934, %v454, -1e+30
    %v962 = vsel %vm934, %v459, -1e+30
    %v963 = vsel %vm934, %v464, -1e+30
    %v964 = vsel %vm934, %v469, -1e+30
    %v965 = vsel %vm934, %v474, -1e+30
    %v966 = vsel %vm934, %v479, -1e+30
    %v967 = vsel %vm934, %v629, -1e+30
    %v968 = vsel %vm934, %v634, -1e+30
    %v969 = vsel %vm934, %v639, -1e+30
    %v970 = vsel %vm934, %v644, -1e+30
    %v971 = vsel %vm934, %v649, -1e+30
    %v972 = vsel %vm934, %v654, -1e+30
    %v973 = vsel %vm934, %v659, -1e+30
    %v974 = vsel %vm934, %v664, -1e+30
    %v975 = vsel %vm934, %v669, -1e+30
    %v976 = vsel %vm934, %v674, -1e+30
    %v977 = vsel %vm934, %v679, -1e+30
    %v978 = vsel %vm934, %v684, -1e+30
    %v979 = vsel %vm934, %v689, -1e+30
    %v980 = vsel %vm934, %v694, -1e+30
    %v981 = vsel %vm934, %v699, -1e+30
    %v982 = vsel %vm934, %v704, -1e+30
    %v983 = vsel %vm934, %v854, -1e+30
    %v984 = vsel %vm934, %v859, -1e+30
    %v985 = vsel %vm934, %v864, -1e+30
    %v986 = vsel %vm934, %v869, -1e+30
    %v987 = vsel %vm934, %v874, -1e+30
    %v988 = vsel %vm934, %v879, -1e+30
    %v989 = vsel %vm934, %v884, -1e+30
    %v990 = vsel %vm934, %v889, -1e+30
    %v991 = vsel %vm934, %v894, -1e+30
    %v992 = vsel %vm934, %v899, -1e+30
    %v993 = vsel %vm934, %v904, -1e+30
    %v994 = vsel %vm934, %v909, -1e+30
    %v995 = vsel %vm934, %v914, -1e+30
    %v996 = vsel %vm934, %v919, -1e+30
    %v997 = vsel %vm934, %v924, -1e+30
    %v998 = vsel %vm934, %v929, -1e+30
    %999 = vmax.xlane.f32.xlu0 %v935
    %v1000 = vpop.xlane.xlu0 %999
    %1001 = vmax.xlane.f32.xlu0 %v936
    %v1002 = vpop.xlane.xlu0 %1001
    %1003 = vmax.xlane.f32.xlu0 %v937
    %v1004 = vpop.xlane.xlu0 %1003
    %1005 = vmax.xlane.f32.xlu0 %v938
    %v1006 = vpop.xlane.xlu0 %1005
    %1007 = vmax.xlane.f32.xlu0 %v939
    %v1008 = vpop.xlane.xlu0 %1007
    %1009 = vmax.xlane.f32.xlu0 %v940
    %v1010 = vpop.xlane.xlu0 %1009
    %1011 = vmax.xlane.f32.xlu0 %v941
    %v1012 = vpop.xlane.xlu0 %1011
    %1013 = vmax.xlane.f32.xlu0 %v942
    %v1014 = vpop.xlane.xlu0 %1013
    %1015 = vmax.xlane.f32.xlu0 %v943
    %v1016 = vpop.xlane.xlu0 %1015
    %1017 = vmax.xlane.f32.xlu0 %v944
    %v1018 = vpop.xlane.xlu0 %1017
    %1019 = vmax.xlane.f32.xlu0 %v945
    %v1020 = vpop.xlane.xlu0 %1019
    %1021 = vmax.xlane.f32.xlu0 %v946
    %v1022 = vpop.xlane.xlu0 %1021
    %1023 = vmax.xlane.f32.xlu0 %v947
    %v1024 = vpop.xlane.xlu0 %1023
    %1025 = vmax.xlane.f32.xlu0 %v948
    %v1026 = vpop.xlane.xlu0 %1025
    %1027 = vmax.xlane.f32.xlu0 %v949
    %v1028 = vpop.xlane.xlu0 %1027
    %1029 = vmax.xlane.f32.xlu0 %v950
    %v1030 = vpop.xlane.xlu0 %1029
    %1031 = vmax.xlane.f32.xlu0 %v951
    %v1032 = vpop.xlane.xlu0 %1031
    %1033 = vmax.xlane.f32.xlu0 %v952
    %v1034 = vpop.xlane.xlu0 %1033
    %1035 = vmax.xlane.f32.xlu0 %v953
    %v1036 = vpop.xlane.xlu0 %1035
    %1037 = vmax.xlane.f32.xlu0 %v954
    %v1038 = vpop.xlane.xlu0 %1037
    %1039 = vmax.xlane.f32.xlu0 %v955
    %v1040 = vpop.xlane.xlu0 %1039
    %1041 = vmax.xlane.f32.xlu0 %v956
    %v1042 = vpop.xlane.xlu0 %1041
    %1043 = vmax.xlane.f32.xlu0 %v957
    %v1044 = vpop.xlane.xlu0 %1043
    %1045 = vmax.xlane.f32.xlu0 %v958
    %v1046 = vpop.xlane.xlu0 %1045
    %1047 = vmax.xlane.f32.xlu0 %v959
    %v1048 = vpop.xlane.xlu0 %1047
    %1049 = vmax.xlane.f32.xlu0 %v960
    %v1050 = vpop.xlane.xlu0 %1049
    %1051 = vmax.xlane.f32.xlu0 %v961
    %v1052 = vpop.xlane.xlu0 %1051
    %1053 = vmax.xlane.f32.xlu0 %v962
    %v1054 = vpop.xlane.xlu0 %1053
    %1055 = vmax.xlane.f32.xlu0 %v963
    %v1056 = vpop.xlane.xlu0 %1055
    %1057 = vmax.xlane.f32.xlu0 %v964
    %v1058 = vpop.xlane.xlu0 %1057
    %1059 = vmax.xlane.f32.xlu0 %v965
    %v1060 = vpop.xlane.xlu0 %1059
    %1061 = vmax.xlane.f32.xlu0 %v966
    %v1062 = vpop.xlane.xlu0 %1061
    %1063 = vmax.xlane.f32.xlu0 %v967
    %v1064 = vpop.xlane.xlu0 %1063
    %1065 = vmax.xlane.f32.xlu0 %v968
    %v1066 = vpop.xlane.xlu0 %1065
    %1067 = vmax.xlane.f32.xlu0 %v969
    %v1068 = vpop.xlane.xlu0 %1067
    %1069 = vmax.xlane.f32.xlu0 %v970
    %v1070 = vpop.xlane.xlu0 %1069
    %1071 = vmax.xlane.f32.xlu0 %v971
    %v1072 = vpop.xlane.xlu0 %1071
    %1073 = vmax.xlane.f32.xlu0 %v972
    %v1074 = vpop.xlane.xlu0 %1073
    %1075 = vmax.xlane.f32.xlu0 %v973
    %v1076 = vpop.xlane.xlu0 %1075
    %1077 = vmax.xlane.f32.xlu0 %v974
    %v1078 = vpop.xlane.xlu0 %1077
    %1079 = vmax.xlane.f32.xlu0 %v975
    %v1080 = vpop.xlane.xlu0 %1079
    %1081 = vmax.xlane.f32.xlu0 %v976
    %v1082 = vpop.xlane.xlu0 %1081
    %1083 = vmax.xlane.f32.xlu0 %v977
    %v1084 = vpop.xlane.xlu0 %1083
    %1085 = vmax.xlane.f32.xlu0 %v978
    %v1086 = vpop.xlane.xlu0 %1085
    %1087 = vmax.xlane.f32.xlu0 %v979
    %v1088 = vpop.xlane.xlu0 %1087
    %1089 = vmax.xlane.f32.xlu0 %v980
    %v1090 = vpop.xlane.xlu0 %1089
    %1091 = vmax.xlane.f32.xlu0 %v981
    %v1092 = vpop.xlane.xlu0 %1091
    %1093 = vmax.xlane.f32.xlu0 %v982
    %v1094 = vpop.xlane.xlu0 %1093
    %1095 = vmax.xlane.f32.xlu0 %v983
    %v1096 = vpop.xlane.xlu0 %1095
    %1097 = vmax.xlane.f32.xlu0 %v984
    %v1098 = vpop.xlane.xlu0 %1097
    %1099 = vmax.xlane.f32.xlu0 %v985
    %v1100 = vpop.xlane.xlu0 %1099
    %1101 = vmax.xlane.f32.xlu0 %v986
    %v1102 = vpop.xlane.xlu0 %1101
    %1103 = vmax.xlane.f32.xlu0 %v987
    %v1104 = vpop.xlane.xlu0 %1103
    %1105 = vmax.xlane.f32.xlu0 %v988
    %v1106 = vpop.xlane.xlu0 %1105
    %1107 = vmax.xlane.f32.xlu0 %v989
    %v1108 = vpop.xlane.xlu0 %1107
    %1109 = vmax.xlane.f32.xlu0 %v990
    %v1110 = vpop.xlane.xlu0 %1109
    %1111 = vmax.xlane.f32.xlu0 %v991
    %v1112 = vpop.xlane.xlu0 %1111
    %1113 = vmax.xlane.f32.xlu0 %v992
    %v1114 = vpop.xlane.xlu0 %1113
    %1115 = vmax.xlane.f32.xlu0 %v993
    %v1116 = vpop.xlane.xlu0 %1115
    %1117 = vmax.xlane.f32.xlu0 %v994
    %v1118 = vpop.xlane.xlu0 %1117
    %1119 = vmax.xlane.f32.xlu0 %v995
    %v1120 = vpop.xlane.xlu0 %1119
    %1121 = vmax.xlane.f32.xlu0 %v996
    %v1122 = vpop.xlane.xlu0 %1121
    %1123 = vmax.xlane.f32.xlu0 %v997
    %v1124 = vpop.xlane.xlu0 %1123
    %1125 = vmax.xlane.f32.xlu0 %v998
    %v1126 = vpop.xlane.xlu0 %1125
    %v1127 = vsub.f32 %v935, %v1000
    %v1128 = vsub.f32 %v936, %v1002
    %v1129 = vsub.f32 %v937, %v1004
    %v1130 = vsub.f32 %v938, %v1006
    %v1131 = vsub.f32 %v939, %v1008
    %v1132 = vsub.f32 %v940, %v1010
    %v1133 = vsub.f32 %v941, %v1012
    %v1134 = vsub.f32 %v942, %v1014
    %v1135 = vsub.f32 %v943, %v1016
    %v1136 = vsub.f32 %v944, %v1018
    %v1137 = vsub.f32 %v945, %v1020
    %v1138 = vsub.f32 %v946, %v1022
    %v1139 = vsub.f32 %v947, %v1024
    %v1140 = vsub.f32 %v948, %v1026
    %v1141 = vsub.f32 %v949, %v1028
    %v1142 = vsub.f32 %v950, %v1030
    %v1143 = vsub.f32 %v951, %v1032
    %v1144 = vsub.f32 %v952, %v1034
    %v1145 = vsub.f32 %v953, %v1036
    %v1146 = vsub.f32 %v954, %v1038
    %v1147 = vsub.f32 %v955, %v1040
    %v1148 = vsub.f32 %v956, %v1042
    %v1149 = vsub.f32 %v957, %v1044
    %v1150 = vsub.f32 %v958, %v1046
    %v1151 = vsub.f32 %v959, %v1048
    %v1152 = vsub.f32 %v960, %v1050
    %v1153 = vsub.f32 %v961, %v1052
    %v1154 = vsub.f32 %v962, %v1054
    %v1155 = vsub.f32 %v963, %v1056
    %v1156 = vsub.f32 %v964, %v1058
    %v1157 = vsub.f32 %v965, %v1060
    %v1158 = vsub.f32 %v966, %v1062
    %v1159 = vsub.f32 %v967, %v1064
    %v1160 = vsub.f32 %v968, %v1066
    %v1161 = vsub.f32 %v969, %v1068
    %v1162 = vsub.f32 %v970, %v1070
    %v1163 = vsub.f32 %v971, %v1072
    %v1164 = vsub.f32 %v972, %v1074
    %v1165 = vsub.f32 %v973, %v1076
    %v1166 = vsub.f32 %v974, %v1078
    %v1167 = vsub.f32 %v975, %v1080
    %v1168 = vsub.f32 %v976, %v1082
    %v1169 = vsub.f32 %v977, %v1084
    %v1170 = vsub.f32 %v978, %v1086
    %v1171 = vsub.f32 %v979, %v1088
    %v1172 = vsub.f32 %v980, %v1090
    %v1173 = vsub.f32 %v981, %v1092
    %v1174 = vsub.f32 %v982, %v1094
    %v1175 = vsub.f32 %v983, %v1096
    %v1176 = vsub.f32 %v984, %v1098
    %v1177 = vsub.f32 %v985, %v1100
    %v1178 = vsub.f32 %v986, %v1102
    %v1179 = vsub.f32 %v987, %v1104
    %v1180 = vsub.f32 %v988, %v1106
    %v1181 = vsub.f32 %v989, %v1108
    %v1182 = vsub.f32 %v990, %v1110
    %v1183 = vsub.f32 %v991, %v1112
    %v1184 = vsub.f32 %v992, %v1114
    %v1185 = vsub.f32 %v993, %v1116
    %v1186 = vsub.f32 %v994, %v1118
    %v1187 = vsub.f32 %v995, %v1120
    %v1188 = vsub.f32 %v996, %v1122
    %v1189 = vsub.f32 %v997, %v1124
    %v1190 = vsub.f32 %v998, %v1126
    %v1191 = vmul.f32 %v1127, 1.442695
    %v1192 = vpow.pop %v1191
    %v1193 = vmul.f32 %v1128, 1.442695
    %v1194 = vpow.pop %v1193
    %v1195 = vmul.f32 %v1129, 1.442695
    %v1196 = vpow.pop %v1195
    %v1197 = vmul.f32 %v1130, 1.442695
    %v1198 = vpow.pop %v1197
    %v1199 = vmul.f32 %v1131, 1.442695
    %v1200 = vpow.pop %v1199
    %v1201 = vmul.f32 %v1132, 1.442695
    %v1202 = vpow.pop %v1201
    %v1203 = vmul.f32 %v1133, 1.442695
    %v1204 = vpow.pop %v1203
    %v1205 = vmul.f32 %v1134, 1.442695
    %v1206 = vpow.pop %v1205
    %v1207 = vmul.f32 %v1135, 1.442695
    %v1208 = vpow.pop %v1207
    %v1209 = vmul.f32 %v1136, 1.442695
    %v1210 = vpow.pop %v1209
    %v1211 = vmul.f32 %v1137, 1.442695
    %v1212 = vpow.pop %v1211
    %v1213 = vmul.f32 %v1138, 1.442695
    %v1214 = vpow.pop %v1213
    %v1215 = vmul.f32 %v1139, 1.442695
    %v1216 = vpow.pop %v1215
    %v1217 = vmul.f32 %v1140, 1.442695
    %v1218 = vpow.pop %v1217
    %v1219 = vmul.f32 %v1141, 1.442695
    %v1220 = vpow.pop %v1219
    %v1221 = vmul.f32 %v1142, 1.442695
    %v1222 = vpow.pop %v1221
    %v1223 = vmul.f32 %v1143, 1.442695
    %v1224 = vpow.pop %v1223
    %v1225 = vmul.f32 %v1144, 1.442695
    %v1226 = vpow.pop %v1225
    %v1227 = vmul.f32 %v1145, 1.442695
    %v1228 = vpow.pop %v1227
    %v1229 = vmul.f32 %v1146, 1.442695
    %v1230 = vpow.pop %v1229
    %v1231 = vmul.f32 %v1147, 1.442695
    %v1232 = vpow.pop %v1231
    %v1233 = vmul.f32 %v1148, 1.442695
    %v1234 = vpow.pop %v1233
    %v1235 = vmul.f32 %v1149, 1.442695
    %v1236 = vpow.pop %v1235
    %v1237 = vmul.f32 %v1150, 1.442695
    %v1238 = vpow.pop %v1237
    %v1239 = vmul.f32 %v1151, 1.442695
    %v1240 = vpow.pop %v1239
    %v1241 = vmul.f32 %v1152, 1.442695
    %v1242 = vpow.pop %v1241
    %v1243 = vmul.f32 %v1153, 1.442695
    %v1244 = vpow.pop %v1243
    %v1245 = vmul.f32 %v1154, 1.442695
    %v1246 = vpow.pop %v1245
    %v1247 = vmul.f32 %v1155, 1.442695
    %v1248 = vpow.pop %v1247
    %v1249 = vmul.f32 %v1156, 1.442695
    %v1250 = vpow.pop %v1249
    %v1251 = vmul.f32 %v1157, 1.442695
    %v1252 = vpow.pop %v1251
    %v1253 = vmul.f32 %v1158, 1.442695
    %v1254 = vpow.pop %v1253
    %v1255 = vmul.f32 %v1159, 1.442695
    %v1256 = vpow.pop %v1255
    %v1257 = vmul.f32 %v1160, 1.442695
    %v1258 = vpow.pop %v1257
    %v1259 = vmul.f32 %v1161, 1.442695
    %v1260 = vpow.pop %v1259
    %v1261 = vmul.f32 %v1162, 1.442695
    %v1262 = vpow.pop %v1261
    %v1263 = vmul.f32 %v1163, 1.442695
    %v1264 = vpow.pop %v1263
    %v1265 = vmul.f32 %v1164, 1.442695
    %v1266 = vpow.pop %v1265
    %v1267 = vmul.f32 %v1165, 1.442695
    %v1268 = vpow.pop %v1267
    %v1269 = vmul.f32 %v1166, 1.442695
    %v1270 = vpow.pop %v1269
    %v1271 = vmul.f32 %v1167, 1.442695
    %v1272 = vpow.pop %v1271
    %v1273 = vmul.f32 %v1168, 1.442695
    %v1274 = vpow.pop %v1273
    %v1275 = vmul.f32 %v1169, 1.442695
    %v1276 = vpow.pop %v1275
    %v1277 = vmul.f32 %v1170, 1.442695
    %v1278 = vpow.pop %v1277
    %v1279 = vmul.f32 %v1171, 1.442695
    %v1280 = vpow.pop %v1279
    %v1281 = vmul.f32 %v1172, 1.442695
    %v1282 = vpow.pop %v1281
    %v1283 = vmul.f32 %v1173, 1.442695
    %v1284 = vpow.pop %v1283
    %v1285 = vmul.f32 %v1174, 1.442695
    %v1286 = vpow.pop %v1285
    %v1287 = vmul.f32 %v1175, 1.442695
    %v1288 = vpow.pop %v1287
    %v1289 = vmul.f32 %v1176, 1.442695
    %v1290 = vpow.pop %v1289
    %v1291 = vmul.f32 %v1177, 1.442695
    %v1292 = vpow.pop %v1291
    %v1293 = vmul.f32 %v1178, 1.442695
    %v1294 = vpow.pop %v1293
    %v1295 = vmul.f32 %v1179, 1.442695
    %v1296 = vpow.pop %v1295
    %v1297 = vmul.f32 %v1180, 1.442695
    %v1298 = vpow.pop %v1297
    %v1299 = vmul.f32 %v1181, 1.442695
    %v1300 = vpow.pop %v1299
    %v1301 = vmul.f32 %v1182, 1.442695
    %v1302 = vpow.pop %v1301
    %v1303 = vmul.f32 %v1183, 1.442695
    %v1304 = vpow.pop %v1303
    %v1305 = vmul.f32 %v1184, 1.442695
    %v1306 = vpow.pop %v1305
    %v1307 = vmul.f32 %v1185, 1.442695
    %v1308 = vpow.pop %v1307
    %v1309 = vmul.f32 %v1186, 1.442695
    %v1310 = vpow.pop %v1309
    %v1311 = vmul.f32 %v1187, 1.442695
    %v1312 = vpow.pop %v1311
    %v1313 = vmul.f32 %v1188, 1.442695
    %v1314 = vpow.pop %v1313
    %v1315 = vmul.f32 %v1189, 1.442695
    %v1316 = vpow.pop %v1315
    %v1317 = vmul.f32 %v1190, 1.442695
    %v1318 = vpow.pop %v1317
    %1319 = vadd.xlane.f32.xlu0 %v1192
    %v1320 = vpop.xlane.xlu0 %1319
    %1321 = vadd.xlane.f32.xlu0 %v1194
    %v1322 = vpop.xlane.xlu0 %1321
    %1323 = vadd.xlane.f32.xlu0 %v1196
    %v1324 = vpop.xlane.xlu0 %1323
    %1325 = vadd.xlane.f32.xlu0 %v1198
    %v1326 = vpop.xlane.xlu0 %1325
    %1327 = vadd.xlane.f32.xlu0 %v1200
    %v1328 = vpop.xlane.xlu0 %1327
    %1329 = vadd.xlane.f32.xlu0 %v1202
    %v1330 = vpop.xlane.xlu0 %1329
    %1331 = vadd.xlane.f32.xlu0 %v1204
    %v1332 = vpop.xlane.xlu0 %1331
    %1333 = vadd.xlane.f32.xlu0 %v1206
    %v1334 = vpop.xlane.xlu0 %1333
    %1335 = vadd.xlane.f32.xlu0 %v1208
    %v1336 = vpop.xlane.xlu0 %1335
    %1337 = vadd.xlane.f32.xlu0 %v1210
    %v1338 = vpop.xlane.xlu0 %1337
    %1339 = vadd.xlane.f32.xlu0 %v1212
    %v1340 = vpop.xlane.xlu0 %1339
    %1341 = vadd.xlane.f32.xlu0 %v1214
    %v1342 = vpop.xlane.xlu0 %1341
    %1343 = vadd.xlane.f32.xlu0 %v1216
    %v1344 = vpop.xlane.xlu0 %1343
    %1345 = vadd.xlane.f32.xlu0 %v1218
    %v1346 = vpop.xlane.xlu0 %1345
    %1347 = vadd.xlane.f32.xlu0 %v1220
    %v1348 = vpop.xlane.xlu0 %1347
    %1349 = vadd.xlane.f32.xlu0 %v1222
    %v1350 = vpop.xlane.xlu0 %1349
    %1351 = vadd.xlane.f32.xlu0 %v1224
    %v1352 = vpop.xlane.xlu0 %1351
    %1353 = vadd.xlane.f32.xlu0 %v1226
    %v1354 = vpop.xlane.xlu0 %1353
    %1355 = vadd.xlane.f32.xlu0 %v1228
    %v1356 = vpop.xlane.xlu0 %1355
    %1357 = vadd.xlane.f32.xlu0 %v1230
    %v1358 = vpop.xlane.xlu0 %1357
    %1359 = vadd.xlane.f32.xlu0 %v1232
    %v1360 = vpop.xlane.xlu0 %1359
    %1361 = vadd.xlane.f32.xlu0 %v1234
    %v1362 = vpop.xlane.xlu0 %1361
    %1363 = vadd.xlane.f32.xlu0 %v1236
    %v1364 = vpop.xlane.xlu0 %1363
    %1365 = vadd.xlane.f32.xlu0 %v1238
    %v1366 = vpop.xlane.xlu0 %1365
    %1367 = vadd.xlane.f32.xlu0 %v1240
    %v1368 = vpop.xlane.xlu0 %1367
    %1369 = vadd.xlane.f32.xlu0 %v1242
    %v1370 = vpop.xlane.xlu0 %1369
    %1371 = vadd.xlane.f32.xlu0 %v1244
    %v1372 = vpop.xlane.xlu0 %1371
    %1373 = vadd.xlane.f32.xlu0 %v1246
    %v1374 = vpop.xlane.xlu0 %1373
    %1375 = vadd.xlane.f32.xlu0 %v1248
    %v1376 = vpop.xlane.xlu0 %1375
    %1377 = vadd.xlane.f32.xlu0 %v1250
    %v1378 = vpop.xlane.xlu0 %1377
    %1379 = vadd.xlane.f32.xlu0 %v1252
    %v1380 = vpop.xlane.xlu0 %1379
    %1381 = vadd.xlane.f32.xlu0 %v1254
    %v1382 = vpop.xlane.xlu0 %1381
    %1383 = vadd.xlane.f32.xlu0 %v1256
    %v1384 = vpop.xlane.xlu0 %1383
    %1385 = vadd.xlane.f32.xlu0 %v1258
    %v1386 = vpop.xlane.xlu0 %1385
    %1387 = vadd.xlane.f32.xlu0 %v1260
    %v1388 = vpop.xlane.xlu0 %1387
    %1389 = vadd.xlane.f32.xlu0 %v1262
    %v1390 = vpop.xlane.xlu0 %1389
    %1391 = vadd.xlane.f32.xlu0 %v1264
    %v1392 = vpop.xlane.xlu0 %1391
    %1393 = vadd.xlane.f32.xlu0 %v1266
    %v1394 = vpop.xlane.xlu0 %1393
    %1395 = vadd.xlane.f32.xlu0 %v1268
    %v1396 = vpop.xlane.xlu0 %1395
    %1397 = vadd.xlane.f32.xlu0 %v1270
    %v1398 = vpop.xlane.xlu0 %1397
    %1399 = vadd.xlane.f32.xlu0 %v1272
    %v1400 = vpop.xlane.xlu0 %1399
    %1401 = vadd.xlane.f32.xlu0 %v1274
    %v1402 = vpop.xlane.xlu0 %1401
    %1403 = vadd.xlane.f32.xlu0 %v1276
    %v1404 = vpop.xlane.xlu0 %1403
    %1405 = vadd.xlane.f32.xlu0 %v1278
    %v1406 = vpop.xlane.xlu0 %1405
    %1407 = vadd.xlane.f32.xlu0 %v1280
    %v1408 = vpop.xlane.xlu0 %1407
    %1409 = vadd.xlane.f32.xlu0 %v1282
    %v1410 = vpop.xlane.xlu0 %1409
    %1411 = vadd.xlane.f32.xlu0 %v1284
    %v1412 = vpop.xlane.xlu0 %1411
    %1413 = vadd.xlane.f32.xlu0 %v1286
    %v1414 = vpop.xlane.xlu0 %1413
    %1415 = vadd.xlane.f32.xlu0 %v1288
    %v1416 = vpop.xlane.xlu0 %1415
    %1417 = vadd.xlane.f32.xlu0 %v1290
    %v1418 = vpop.xlane.xlu0 %1417
    %1419 = vadd.xlane.f32.xlu0 %v1292
    %v1420 = vpop.xlane.xlu0 %1419
    %1421 = vadd.xlane.f32.xlu0 %v1294
    %v1422 = vpop.xlane.xlu0 %1421
    %1423 = vadd.xlane.f32.xlu0 %v1296
    %v1424 = vpop.xlane.xlu0 %1423
    %1425 = vadd.xlane.f32.xlu0 %v1298
    %v1426 = vpop.xlane.xlu0 %1425
    %1427 = vadd.xlane.f32.xlu0 %v1300
    %v1428 = vpop.xlane.xlu0 %1427
    %1429 = vadd.xlane.f32.xlu0 %v1302
    %v1430 = vpop.xlane.xlu0 %1429
    %1431 = vadd.xlane.f32.xlu0 %v1304
    %v1432 = vpop.xlane.xlu0 %1431
    %1433 = vadd.xlane.f32.xlu0 %v1306
    %v1434 = vpop.xlane.xlu0 %1433
    %1435 = vadd.xlane.f32.xlu0 %v1308
    %v1436 = vpop.xlane.xlu0 %1435
    %1437 = vadd.xlane.f32.xlu0 %v1310
    %v1438 = vpop.xlane.xlu0 %1437
    %1439 = vadd.xlane.f32.xlu0 %v1312
    %v1440 = vpop.xlane.xlu0 %1439
    %1441 = vadd.xlane.f32.xlu0 %v1314
    %v1442 = vpop.xlane.xlu0 %1441
    %1443 = vadd.xlane.f32.xlu0 %v1316
    %v1444 = vpop.xlane.xlu0 %1443
    %1445 = vadd.xlane.f32.xlu0 %v1318
    %v1446 = vpop.xlane.xlu0 %1445
    %v1447 = vrcp.pop %v1320
    %v1448 = vrcp.pop %v1322
    %v1449 = vrcp.pop %v1324
    %v1450 = vrcp.pop %v1326
    %v1451 = vrcp.pop %v1328
    %v1452 = vrcp.pop %v1330
    %v1453 = vrcp.pop %v1332
    %v1454 = vrcp.pop %v1334
    %v1455 = vrcp.pop %v1336
    %v1456 = vrcp.pop %v1338
    %v1457 = vrcp.pop %v1340
    %v1458 = vrcp.pop %v1342
    %v1459 = vrcp.pop %v1344
    %v1460 = vrcp.pop %v1346
    %v1461 = vrcp.pop %v1348
    %v1462 = vrcp.pop %v1350
    %v1463 = vrcp.pop %v1352
    %v1464 = vrcp.pop %v1354
    %v1465 = vrcp.pop %v1356
    %v1466 = vrcp.pop %v1358
    %v1467 = vrcp.pop %v1360
    %v1468 = vrcp.pop %v1362
    %v1469 = vrcp.pop %v1364
    %v1470 = vrcp.pop %v1366
    %v1471 = vrcp.pop %v1368
    %v1472 = vrcp.pop %v1370
    %v1473 = vrcp.pop %v1372
    %v1474 = vrcp.pop %v1374
    %v1475 = vrcp.pop %v1376
    %v1476 = vrcp.pop %v1378
    %v1477 = vrcp.pop %v1380
    %v1478 = vrcp.pop %v1382
    %v1479 = vrcp.pop %v1384
    %v1480 = vrcp.pop %v1386
    %v1481 = vrcp.pop %v1388
    %v1482 = vrcp.pop %v1390
    %v1483 = vrcp.pop %v1392
    %v1484 = vrcp.pop %v1394
    %v1485 = vrcp.pop %v1396
    %v1486 = vrcp.pop %v1398
    %v1487 = vrcp.pop %v1400
    %v1488 = vrcp.pop %v1402
    %v1489 = vrcp.pop %v1404
    %v1490 = vrcp.pop %v1406
    %v1491 = vrcp.pop %v1408
    %v1492 = vrcp.pop %v1410
    %v1493 = vrcp.pop %v1412
    %v1494 = vrcp.pop %v1414
    %v1495 = vrcp.pop %v1416
    %v1496 = vrcp.pop %v1418
    %v1497 = vrcp.pop %v1420
    %v1498 = vrcp.pop %v1422
    %v1499 = vrcp.pop %v1424
    %v1500 = vrcp.pop %v1426
    %v1501 = vrcp.pop %v1428
    %v1502 = vrcp.pop %v1430
    %v1503 = vrcp.pop %v1432
    %v1504 = vrcp.pop %v1434
    %v1505 = vrcp.pop %v1436
    %v1506 = vrcp.pop %v1438
    %v1507 = vrcp.pop %v1440
    %v1508 = vrcp.pop %v1442
    %v1509 = vrcp.pop %v1444
    %v1510 = vrcp.pop %v1446
    %v1511 = vmul.f32 %v1320, %v1447
    %v1512 = vmul.f32 %v1322, %v1448
    %v1513 = vmul.f32 %v1324, %v1449
    %v1514 = vmul.f32 %v1326, %v1450
    %v1515 = vmul.f32 %v1328, %v1451
    %v1516 = vmul.f32 %v1330, %v1452
    %v1517 = vmul.f32 %v1332, %v1453
    %v1518 = vmul.f32 %v1334, %v1454
    %v1519 = vmul.f32 %v1336, %v1455
    %v1520 = vmul.f32 %v1338, %v1456
    %v1521 = vmul.f32 %v1340, %v1457
    %v1522 = vmul.f32 %v1342, %v1458
    %v1523 = vmul.f32 %v1344, %v1459
    %v1524 = vmul.f32 %v1346, %v1460
    %v1525 = vmul.f32 %v1348, %v1461
    %v1526 = vmul.f32 %v1350, %v1462
    %v1527 = vmul.f32 %v1352, %v1463
    %v1528 = vmul.f32 %v1354, %v1464
    %v1529 = vmul.f32 %v1356, %v1465
    %v1530 = vmul.f32 %v1358, %v1466
    %v1531 = vmul.f32 %v1360, %v1467
    %v1532 = vmul.f32 %v1362, %v1468
    %v1533 = vmul.f32 %v1364, %v1469
    %v1534 = vmul.f32 %v1366, %v1470
    %v1535 = vmul.f32 %v1368, %v1471
    %v1536 = vmul.f32 %v1370, %v1472
    %v1537 = vmul.f32 %v1372, %v1473
    %v1538 = vmul.f32 %v1374, %v1474
    %v1539 = vmul.f32 %v1376, %v1475
    %v1540 = vmul.f32 %v1378, %v1476
    %v1541 = vmul.f32 %v1380, %v1477
    %v1542 = vmul.f32 %v1382, %v1478
    %v1543 = vmul.f32 %v1384, %v1479
    %v1544 = vmul.f32 %v1386, %v1480
    %v1545 = vmul.f32 %v1388, %v1481
    %v1546 = vmul.f32 %v1390, %v1482
    %v1547 = vmul.f32 %v1392, %v1483
    %v1548 = vmul.f32 %v1394, %v1484
    %v1549 = vmul.f32 %v1396, %v1485
    %v1550 = vmul.f32 %v1398, %v1486
    %v1551 = vmul.f32 %v1400, %v1487
    %v1552 = vmul.f32 %v1402, %v1488
    %v1553 = vmul.f32 %v1404, %v1489
    %v1554 = vmul.f32 %v1406, %v1490
    %v1555 = vmul.f32 %v1408, %v1491
    %v1556 = vmul.f32 %v1410, %v1492
    %v1557 = vmul.f32 %v1412, %v1493
    %v1558 = vmul.f32 %v1414, %v1494
    %v1559 = vmul.f32 %v1416, %v1495
    %v1560 = vmul.f32 %v1418, %v1496
    %v1561 = vmul.f32 %v1420, %v1497
    %v1562 = vmul.f32 %v1422, %v1498
    %v1563 = vmul.f32 %v1424, %v1499
    %v1564 = vmul.f32 %v1426, %v1500
    %v1565 = vmul.f32 %v1428, %v1501
    %v1566 = vmul.f32 %v1430, %v1502
    %v1567 = vmul.f32 %v1432, %v1503
    %v1568 = vmul.f32 %v1434, %v1504
    %v1569 = vmul.f32 %v1436, %v1505
    %v1570 = vmul.f32 %v1438, %v1506
    %v1571 = vmul.f32 %v1440, %v1507
    %v1572 = vmul.f32 %v1442, %v1508
    %v1573 = vmul.f32 %v1444, %v1509
    %v1574 = vmul.f32 %v1446, %v1510
    %v1575 = vsub.f32 2.0, %v1511
    %v1576 = vsub.f32 2.0, %v1512
    %v1577 = vsub.f32 2.0, %v1513
    %v1578 = vsub.f32 2.0, %v1514
    %v1579 = vsub.f32 2.0, %v1515
    %v1580 = vsub.f32 2.0, %v1516
    %v1581 = vsub.f32 2.0, %v1517
    %v1582 = vsub.f32 2.0, %v1518
    %v1583 = vsub.f32 2.0, %v1519
    %v1584 = vsub.f32 2.0, %v1520
    %v1585 = vsub.f32 2.0, %v1521
    %v1586 = vsub.f32 2.0, %v1522
    %v1587 = vsub.f32 2.0, %v1523
    %v1588 = vsub.f32 2.0, %v1524
    %v1589 = vsub.f32 2.0, %v1525
    %v1590 = vsub.f32 2.0, %v1526
    %v1591 = vsub.f32 2.0, %v1527
    %v1592 = vsub.f32 2.0, %v1528
    %v1593 = vsub.f32 2.0, %v1529
    %v1594 = vsub.f32 2.0, %v1530
    %v1595 = vsub.f32 2.0, %v1531
    %v1596 = vsub.f32 2.0, %v1532
    %v1597 = vsub.f32 2.0, %v1533
    %v1598 = vsub.f32 2.0, %v1534
    %v1599 = vsub.f32 2.0, %v1535
    %v1600 = vsub.f32 2.0, %v1536
    %v1601 = vsub.f32 2.0, %v1537
    %v1602 = vsub.f32 2.0, %v1538
    %v1603 = vsub.f32 2.0, %v1539
    %v1604 = vsub.f32 2.0, %v1540
    %v1605 = vsub.f32 2.0, %v1541
    %v1606 = vsub.f32 2.0, %v1542
    %v1607 = vsub.f32 2.0, %v1543
    %v1608 = vsub.f32 2.0, %v1544
    %v1609 = vsub.f32 2.0, %v1545
    %v1610 = vsub.f32 2.0, %v1546
    %v1611 = vsub.f32 2.0, %v1547
    %v1612 = vsub.f32 2.0, %v1548
    %v1613 = vsub.f32 2.0, %v1549
    %v1614 = vsub.f32 2.0, %v1550
    %v1615 = vsub.f32 2.0, %v1551
    %v1616 = vsub.f32 2.0, %v1552
    %v1617 = vsub.f32 2.0, %v1553
    %v1618 = vsub.f32 2.0, %v1554
    %v1619 = vsub.f32 2.0, %v1555
    %v1620 = vsub.f32 2.0, %v1556
    %v1621 = vsub.f32 2.0, %v1557
    %v1622 = vsub.f32 2.0, %v1558
    %v1623 = vsub.f32 2.0, %v1559
    %v1624 = vsub.f32 2.0, %v1560
    %v1625 = vsub.f32 2.0, %v1561
    %v1626 = vsub.f32 2.0, %v1562
    %v1627 = vsub.f32 2.0, %v1563
    %v1628 = vsub.f32 2.0, %v1564
    %v1629 = vsub.f32 2.0, %v1565
    %v1630 = vsub.f32 2.0, %v1566
    %v1631 = vsub.f32 2.0, %v1567
    %v1632 = vsub.f32 2.0, %v1568
    %v1633 = vsub.f32 2.0, %v1569
    %v1634 = vsub.f32 2.0, %v1570
    %v1635 = vsub.f32 2.0, %v1571
    %v1636 = vsub.f32 2.0, %v1572
    %v1637 = vsub.f32 2.0, %v1573
    %v1638 = vsub.f32 2.0, %v1574
    %v1639 = vmul.f32 %v1447, %v1575
    %v1640 = vmul.f32 %v1448, %v1576
    %v1641 = vmul.f32 %v1449, %v1577
    %v1642 = vmul.f32 %v1450, %v1578
    %v1643 = vmul.f32 %v1451, %v1579
    %v1644 = vmul.f32 %v1452, %v1580
    %v1645 = vmul.f32 %v1453, %v1581
    %v1646 = vmul.f32 %v1454, %v1582
    %v1647 = vmul.f32 %v1455, %v1583
    %v1648 = vmul.f32 %v1456, %v1584
    %v1649 = vmul.f32 %v1457, %v1585
    %v1650 = vmul.f32 %v1458, %v1586
    %v1651 = vmul.f32 %v1459, %v1587
    %v1652 = vmul.f32 %v1460, %v1588
    %v1653 = vmul.f32 %v1461, %v1589
    %v1654 = vmul.f32 %v1462, %v1590
    %v1655 = vmul.f32 %v1463, %v1591
    %v1656 = vmul.f32 %v1464, %v1592
    %v1657 = vmul.f32 %v1465, %v1593
    %v1658 = vmul.f32 %v1466, %v1594
    %v1659 = vmul.f32 %v1467, %v1595
    %v1660 = vmul.f32 %v1468, %v1596
    %v1661 = vmul.f32 %v1469, %v1597
    %v1662 = vmul.f32 %v1470, %v1598
    %v1663 = vmul.f32 %v1471, %v1599
    %v1664 = vmul.f32 %v1472, %v1600
    %v1665 = vmul.f32 %v1473, %v1601
    %v1666 = vmul.f32 %v1474, %v1602
    %v1667 = vmul.f32 %v1475, %v1603
    %v1668 = vmul.f32 %v1476, %v1604
    %v1669 = vmul.f32 %v1477, %v1605
    %v1670 = vmul.f32 %v1478, %v1606
    %v1671 = vmul.f32 %v1479, %v1607
    %v1672 = vmul.f32 %v1480, %v1608
    %v1673 = vmul.f32 %v1481, %v1609
    %v1674 = vmul.f32 %v1482, %v1610
    %v1675 = vmul.f32 %v1483, %v1611
    %v1676 = vmul.f32 %v1484, %v1612
    %v1677 = vmul.f32 %v1485, %v1613
    %v1678 = vmul.f32 %v1486, %v1614
    %v1679 = vmul.f32 %v1487, %v1615
    %v1680 = vmul.f32 %v1488, %v1616
    %v1681 = vmul.f32 %v1489, %v1617
    %v1682 = vmul.f32 %v1490, %v1618
    %v1683 = vmul.f32 %v1491, %v1619
    %v1684 = vmul.f32 %v1492, %v1620
    %v1685 = vmul.f32 %v1493, %v1621
    %v1686 = vmul.f32 %v1494, %v1622
    %v1687 = vmul.f32 %v1495, %v1623
    %v1688 = vmul.f32 %v1496, %v1624
    %v1689 = vmul.f32 %v1497, %v1625
    %v1690 = vmul.f32 %v1498, %v1626
    %v1691 = vmul.f32 %v1499, %v1627
    %v1692 = vmul.f32 %v1500, %v1628
    %v1693 = vmul.f32 %v1501, %v1629
    %v1694 = vmul.f32 %v1502, %v1630
    %v1695 = vmul.f32 %v1503, %v1631
    %v1696 = vmul.f32 %v1504, %v1632
    %v1697 = vmul.f32 %v1505, %v1633
    %v1698 = vmul.f32 %v1506, %v1634
    %v1699 = vmul.f32 %v1507, %v1635
    %v1700 = vmul.f32 %v1508, %v1636
    %v1701 = vmul.f32 %v1509, %v1637
    %v1702 = vmul.f32 %v1510, %v1638
    %v1703 = vmul.f32 %v1192, %v1639
    %v1704 = vmul.f32 %v1194, %v1640
    %v1705 = vmul.f32 %v1196, %v1641
    %v1706 = vmul.f32 %v1198, %v1642
    %v1707 = vmul.f32 %v1200, %v1643
    %v1708 = vmul.f32 %v1202, %v1644
    %v1709 = vmul.f32 %v1204, %v1645
    %v1710 = vmul.f32 %v1206, %v1646
    %v1711 = vmul.f32 %v1208, %v1647
    %v1712 = vmul.f32 %v1210, %v1648
    %v1713 = vmul.f32 %v1212, %v1649
    %v1714 = vmul.f32 %v1214, %v1650
    %v1715 = vmul.f32 %v1216, %v1651
    %v1716 = vmul.f32 %v1218, %v1652
    %v1717 = vmul.f32 %v1220, %v1653
    %v1718 = vmul.f32 %v1222, %v1654
    %v1719 = vmul.f32 %v1224, %v1655
    %v1720 = vmul.f32 %v1226, %v1656
    %v1721 = vmul.f32 %v1228, %v1657
    %v1722 = vmul.f32 %v1230, %v1658
    %v1723 = vmul.f32 %v1232, %v1659
    %v1724 = vmul.f32 %v1234, %v1660
    %v1725 = vmul.f32 %v1236, %v1661
    %v1726 = vmul.f32 %v1238, %v1662
    %v1727 = vmul.f32 %v1240, %v1663
    %v1728 = vmul.f32 %v1242, %v1664
    %v1729 = vmul.f32 %v1244, %v1665
    %v1730 = vmul.f32 %v1246, %v1666
    %v1731 = vmul.f32 %v1248, %v1667
    %v1732 = vmul.f32 %v1250, %v1668
    %v1733 = vmul.f32 %v1252, %v1669
    %v1734 = vmul.f32 %v1254, %v1670
    %v1735 = vmul.f32 %v1256, %v1671
    %v1736 = vmul.f32 %v1258, %v1672
    %v1737 = vmul.f32 %v1260, %v1673
    %v1738 = vmul.f32 %v1262, %v1674
    %v1739 = vmul.f32 %v1264, %v1675
    %v1740 = vmul.f32 %v1266, %v1676
    %v1741 = vmul.f32 %v1268, %v1677
    %v1742 = vmul.f32 %v1270, %v1678
    %v1743 = vmul.f32 %v1272, %v1679
    %v1744 = vmul.f32 %v1274, %v1680
    %v1745 = vmul.f32 %v1276, %v1681
    %v1746 = vmul.f32 %v1278, %v1682
    %v1747 = vmul.f32 %v1280, %v1683
    %v1748 = vmul.f32 %v1282, %v1684
    %v1749 = vmul.f32 %v1284, %v1685
    %v1750 = vmul.f32 %v1286, %v1686
    %v1751 = vmul.f32 %v1288, %v1687
    %v1752 = vmul.f32 %v1290, %v1688
    %v1753 = vmul.f32 %v1292, %v1689
    %v1754 = vmul.f32 %v1294, %v1690
    %v1755 = vmul.f32 %v1296, %v1691
    %v1756 = vmul.f32 %v1298, %v1692
    %v1757 = vmul.f32 %v1300, %v1693
    %v1758 = vmul.f32 %v1302, %v1694
    %v1759 = vmul.f32 %v1304, %v1695
    %v1760 = vmul.f32 %v1306, %v1696
    %v1761 = vmul.f32 %v1308, %v1697
    %v1762 = vmul.f32 %v1310, %v1698
    %v1763 = vmul.f32 %v1312, %v1699
    %v1764 = vmul.f32 %v1314, %v1700
    %v1765 = vmul.f32 %v1316, %v1701
    %v1766 = vmul.f32 %v1318, %v1702
    %1767 = vmatprep.subr.mxu0 0.0
    %1768 = vmatpush1.xpose.msra.mxu0 %v1703
    %1769 = vmatprep.subr.mxu0 0.0
    %1770 = vmatpush1.xpose.msra.mxu0 %v1704
    %1771 = vmatprep.subr.mxu0 0.0
    %1772 = vmatpush1.xpose.msra.mxu0 %v1705
    %1773 = vmatprep.subr.mxu0 0.0
    %1774 = vmatpush1.xpose.msra.mxu0 %v1706
    %1775 = vmatprep.subr.mxu0 0.0
    %1776 = vmatpush1.xpose.msra.mxu0 %v1707
    %1777 = vmatprep.subr.mxu0 0.0
    %1778 = vmatpush1.xpose.msra.mxu0 %v1708
    %1779 = vmatprep.subr.mxu0 0.0
    %1780 = vmatpush1.xpose.msra.mxu0 %v1709
    %1781 = vmatprep.subr.mxu0 0.0
    %1782 = vmatpush1.xpose.msra.mxu0 %v1710
    %1783 = vmatprep.subr.mxu0 0.0
    %1784 = vmatpush1.xpose.msra.mxu0 %v1711
    %1785 = vmatprep.subr.mxu0 0.0
    %1786 = vmatpush1.xpose.msra.mxu0 %v1712
    %1787 = vmatprep.subr.mxu0 0.0
    %1788 = vmatpush1.xpose.msra.mxu0 %v1713
    %1789 = vmatprep.subr.mxu0 0.0
    %1790 = vmatpush1.xpose.msra.mxu0 %v1714
    %1791 = vmatprep.subr.mxu0 0.0
    %1792 = vmatpush1.xpose.msra.mxu0 %v1715
    %1793 = vmatprep.subr.mxu0 0.0
    %1794 = vmatpush1.xpose.msra.mxu0 %v1716
    %1795 = vmatprep.subr.mxu0 0.0
    %1796 = vmatpush1.xpose.msra.mxu0 %v1717
    %1797 = vmatprep.subr.mxu0 0.0
    %1798 = vmatpush1.xpose.msra.mxu0 %v1718
    %1799 = vmatprep.subr.mxu0 0.0
    %1800 = vmatpush1.xpose.msra.mxu0 0.0
    %1801 = vmatprep.subr.mxu0 0.0
    %1802 = vmatpush1.xpose.msra.mxu0 0.0
    %1803 = vmatprep.subr.mxu0 0.0
    %1804 = vmatpush1.xpose.msra.mxu0 0.0
    %1805 = vmatprep.subr.mxu0 0.0
    %1806 = vmatpush1.xpose.msra.mxu0 0.0
    %1807 = vmatprep.subr.mxu0 0.0
    %1808 = vmatpush1.xpose.msra.mxu0 0.0
    %1809 = vmatprep.subr.mxu0 0.0
    %1810 = vmatpush1.xpose.msra.mxu0 0.0
    %1811 = vmatprep.subr.mxu0 0.0
    %1812 = vmatpush1.xpose.msra.mxu0 0.0
    %1813 = vmatprep.subr.mxu0 0.0
    %1814 = vmatpush1.xpose.msra.mxu0 0.0
    %1815 = vmatprep.subr.mxu0 0.0
    %1816 = vmatpush1.xpose.msra.mxu0 0.0
    %1817 = vmatprep.subr.mxu0 0.0
    %1818 = vmatpush1.xpose.msra.mxu0 0.0
    %1819 = vmatprep.subr.mxu0 0.0
    %1820 = vmatpush1.xpose.msra.mxu0 0.0
    %1821 = vmatprep.subr.mxu0 0.0
    %1822 = vmatpush1.xpose.msra.mxu0 0.0
    %1823 = vmatprep.subr.mxu0 0.0
    %1824 = vmatpush1.xpose.msra.mxu0 0.0
    %1825 = vmatprep.subr.mxu0 0.0
    %1826 = vmatpush1.xpose.msra.mxu0 0.0
    %1827 = vmatprep.subr.mxu0 0.0
    %1828 = vmatpush1.xpose.msra.mxu0 0.0
    %1829 = vmatprep.subr.mxu0 0.0
    %1830 = vmatpush1.xpose.msra.mxu0 0.0
    %1831 = vmatprep.mubr.f32.mxu0 0.0
    %1832 = vmatmul.mubr.f32.gmra.mrb[0].mxu0 %v23
    %v1833 = vpop.f32.mrb[0].mxu0
    %v1834 = vadd.f32 0.0, %v1833
    %v1835 = vpop.f32.mrb[0].mxu0
    %1836 = vdwg.mxu0
    %1837 = vmatprep.subr.mxu0 0.0
    %1838 = vmatpush1.xpose.msra.mxu0 %v1719
    %1839 = vmatprep.subr.mxu0 0.0
    %1840 = vmatpush1.xpose.msra.mxu0 %v1720
    %1841 = vmatprep.subr.mxu0 0.0
    %1842 = vmatpush1.xpose.msra.mxu0 %v1721
    %1843 = vmatprep.subr.mxu0 0.0
    %1844 = vmatpush1.xpose.msra.mxu0 %v1722
    %1845 = vmatprep.subr.mxu0 0.0
    %1846 = vmatpush1.xpose.msra.mxu0 %v1723
    %1847 = vmatprep.subr.mxu0 0.0
    %1848 = vmatpush1.xpose.msra.mxu0 %v1724
    %1849 = vmatprep.subr.mxu0 0.0
    %1850 = vmatpush1.xpose.msra.mxu0 %v1725
    %1851 = vmatprep.subr.mxu0 0.0
    %1852 = vmatpush1.xpose.msra.mxu0 %v1726
    %1853 = vmatprep.subr.mxu0 0.0
    %1854 = vmatpush1.xpose.msra.mxu0 %v1727
    %1855 = vmatprep.subr.mxu0 0.0
    %1856 = vmatpush1.xpose.msra.mxu0 %v1728
    %1857 = vmatprep.subr.mxu0 0.0
    %1858 = vmatpush1.xpose.msra.mxu0 %v1729
    %1859 = vmatprep.subr.mxu0 0.0
    %1860 = vmatpush1.xpose.msra.mxu0 %v1730
    %1861 = vmatprep.subr.mxu0 0.0
    %1862 = vmatpush1.xpose.msra.mxu0 %v1731
    %1863 = vmatprep.subr.mxu0 0.0
    %1864 = vmatpush1.xpose.msra.mxu0 %v1732
    %1865 = vmatprep.subr.mxu0 0.0
    %1866 = vmatpush1.xpose.msra.mxu0 %v1733
    %1867 = vmatprep.subr.mxu0 0.0
    %1868 = vmatpush1.xpose.msra.mxu0 %v1734
    %1869 = vmatprep.subr.mxu0 0.0
    %1870 = vmatpush1.xpose.msra.mxu0 0.0
    %1871 = vmatprep.subr.mxu0 0.0
    %1872 = vmatpush1.xpose.msra.mxu0 0.0
    %1873 = vmatprep.subr.mxu0 0.0
    %1874 = vmatpush1.xpose.msra.mxu0 0.0
    %1875 = vmatprep.subr.mxu0 0.0
    %1876 = vmatpush1.xpose.msra.mxu0 0.0
    %1877 = vmatprep.subr.mxu0 0.0
    %1878 = vmatpush1.xpose.msra.mxu0 0.0
    %1879 = vmatprep.subr.mxu0 0.0
    %1880 = vmatpush1.xpose.msra.mxu0 0.0
    %1881 = vmatprep.subr.mxu0 0.0
    %1882 = vmatpush1.xpose.msra.mxu0 0.0
    %1883 = vmatprep.subr.mxu0 0.0
    %1884 = vmatpush1.xpose.msra.mxu0 0.0
    %1885 = vmatprep.subr.mxu0 0.0
    %1886 = vmatpush1.xpose.msra.mxu0 0.0
    %1887 = vmatprep.subr.mxu0 0.0
    %1888 = vmatpush1.xpose.msra.mxu0 0.0
    %1889 = vmatprep.subr.mxu0 0.0
    %1890 = vmatpush1.xpose.msra.mxu0 0.0
    %1891 = vmatprep.subr.mxu0 0.0
    %1892 = vmatpush1.xpose.msra.mxu0 0.0
    %1893 = vmatprep.subr.mxu0 0.0
    %1894 = vmatpush1.xpose.msra.mxu0 0.0
    %1895 = vmatprep.subr.mxu0 0.0
    %1896 = vmatpush1.xpose.msra.mxu0 0.0
    %1897 = vmatprep.subr.mxu0 0.0
    %1898 = vmatpush1.xpose.msra.mxu0 0.0
    %1899 = vmatprep.subr.mxu0 0.0
    %1900 = vmatpush1.xpose.msra.mxu0 0.0
    %1901 = vmatprep.mubr.f32.mxu0 0.0
    %1902 = vmatmul.mubr.f32.gmra.mrb[0].mxu0 %v24
    %v1903 = vpop.f32.mrb[0].mxu0
    %v1904 = vadd.f32 0.0, %v1903
    %v1905 = vpop.f32.mrb[0].mxu0
    %1906 = vdwg.mxu0
    %1907 = vmatprep.subr.mxu0 0.0
    %1908 = vmatpush1.xpose.msra.mxu0 %v1735
    %1909 = vmatprep.subr.mxu0 0.0
    %1910 = vmatpush1.xpose.msra.mxu0 %v1736
    %1911 = vmatprep.subr.mxu0 0.0
    %1912 = vmatpush1.xpose.msra.mxu0 %v1737
    %1913 = vmatprep.subr.mxu0 0.0
    %1914 = vmatpush1.xpose.msra.mxu0 %v1738
    %1915 = vmatprep.subr.mxu0 0.0
    %1916 = vmatpush1.xpose.msra.mxu0 %v1739
    %1917 = vmatprep.subr.mxu0 0.0
    %1918 = vmatpush1.xpose.msra.mxu0 %v1740
    %1919 = vmatprep.subr.mxu0 0.0
    %1920 = vmatpush1.xpose.msra.mxu0 %v1741
    %1921 = vmatprep.subr.mxu0 0.0
    %1922 = vmatpush1.xpose.msra.mxu0 %v1742
    %1923 = vmatprep.subr.mxu0 0.0
    %1924 = vmatpush1.xpose.msra.mxu0 %v1743
    %1925 = vmatprep.subr.mxu0 0.0
    %1926 = vmatpush1.xpose.msra.mxu0 %v1744
    %1927 = vmatprep.subr.mxu0 0.0
    %1928 = vmatpush1.xpose.msra.mxu0 %v1745
    %1929 = vmatprep.subr.mxu0 0.0
    %1930 = vmatpush1.xpose.msra.mxu0 %v1746
    %1931 = vmatprep.subr.mxu0 0.0
    %1932 = vmatpush1.xpose.msra.mxu0 %v1747
    %1933 = vmatprep.subr.mxu0 0.0
    %1934 = vmatpush1.xpose.msra.mxu0 %v1748
    %1935 = vmatprep.subr.mxu0 0.0
    %1936 = vmatpush1.xpose.msra.mxu0 %v1749
    %1937 = vmatprep.subr.mxu0 0.0
    %1938 = vmatpush1.xpose.msra.mxu0 %v1750
    %1939 = vmatprep.subr.mxu0 0.0
    %1940 = vmatpush1.xpose.msra.mxu0 0.0
    %1941 = vmatprep.subr.mxu0 0.0
    %1942 = vmatpush1.xpose.msra.mxu0 0.0
    %1943 = vmatprep.subr.mxu0 0.0
    %1944 = vmatpush1.xpose.msra.mxu0 0.0
    %1945 = vmatprep.subr.mxu0 0.0
    %1946 = vmatpush1.xpose.msra.mxu0 0.0
    %1947 = vmatprep.subr.mxu0 0.0
    %1948 = vmatpush1.xpose.msra.mxu0 0.0
    %1949 = vmatprep.subr.mxu0 0.0
    %1950 = vmatpush1.xpose.msra.mxu0 0.0
    %1951 = vmatprep.subr.mxu0 0.0
    %1952 = vmatpush1.xpose.msra.mxu0 0.0
    %1953 = vmatprep.subr.mxu0 0.0
    %1954 = vmatpush1.xpose.msra.mxu0 0.0
    %1955 = vmatprep.subr.mxu0 0.0
    %1956 = vmatpush1.xpose.msra.mxu0 0.0
    %1957 = vmatprep.subr.mxu0 0.0
    %1958 = vmatpush1.xpose.msra.mxu0 0.0
    %1959 = vmatprep.subr.mxu0 0.0
    %1960 = vmatpush1.xpose.msra.mxu0 0.0
    %1961 = vmatprep.subr.mxu0 0.0
    %1962 = vmatpush1.xpose.msra.mxu0 0.0
    %1963 = vmatprep.subr.mxu0 0.0
    %1964 = vmatpush1.xpose.msra.mxu0 0.0
    %1965 = vmatprep.subr.mxu0 0.0
    %1966 = vmatpush1.xpose.msra.mxu0 0.0
    %1967 = vmatprep.subr.mxu0 0.0
    %1968 = vmatpush1.xpose.msra.mxu0 0.0
    %1969 = vmatprep.subr.mxu0 0.0
    %1970 = vmatpush1.xpose.msra.mxu0 0.0
    %1971 = vmatprep.mubr.f32.mxu0 0.0
    %1972 = vmatmul.mubr.f32.gmra.mrb[0].mxu0 %v25
    %v1973 = vpop.f32.mrb[0].mxu0
    %v1974 = vadd.f32 0.0, %v1973
    %v1975 = vpop.f32.mrb[0].mxu0
    %1976 = vdwg.mxu0
    %1977 = vmatprep.subr.mxu0 0.0
    %1978 = vmatpush1.xpose.msra.mxu0 %v1751
    %1979 = vmatprep.subr.mxu0 0.0
    %1980 = vmatpush1.xpose.msra.mxu0 %v1752
    %1981 = vmatprep.subr.mxu0 0.0
    %1982 = vmatpush1.xpose.msra.mxu0 %v1753
    %1983 = vmatprep.subr.mxu0 0.0
    %1984 = vmatpush1.xpose.msra.mxu0 %v1754
    %1985 = vmatprep.subr.mxu0 0.0
    %1986 = vmatpush1.xpose.msra.mxu0 %v1755
    %1987 = vmatprep.subr.mxu0 0.0
    %1988 = vmatpush1.xpose.msra.mxu0 %v1756
    %1989 = vmatprep.subr.mxu0 0.0
    %1990 = vmatpush1.xpose.msra.mxu0 %v1757
    %1991 = vmatprep.subr.mxu0 0.0
    %1992 = vmatpush1.xpose.msra.mxu0 %v1758
    %1993 = vmatprep.subr.mxu0 0.0
    %1994 = vmatpush1.xpose.msra.mxu0 %v1759
    %1995 = vmatprep.subr.mxu0 0.0
    %1996 = vmatpush1.xpose.msra.mxu0 %v1760
    %1997 = vmatprep.subr.mxu0 0.0
    %1998 = vmatpush1.xpose.msra.mxu0 %v1761
    %1999 = vmatprep.subr.mxu0 0.0
    %2000 = vmatpush1.xpose.msra.mxu0 %v1762
    %2001 = vmatprep.subr.mxu0 0.0
    %2002 = vmatpush1.xpose.msra.mxu0 %v1763
    %2003 = vmatprep.subr.mxu0 0.0
    %2004 = vmatpush1.xpose.msra.mxu0 %v1764
    %2005 = vmatprep.subr.mxu0 0.0
    %2006 = vmatpush1.xpose.msra.mxu0 %v1765
    %2007 = vmatprep.subr.mxu0 0.0
    %2008 = vmatpush1.xpose.msra.mxu0 %v1766
    %2009 = vmatprep.subr.mxu0 0.0
    %2010 = vmatpush1.xpose.msra.mxu0 0.0
    %2011 = vmatprep.subr.mxu0 0.0
    %2012 = vmatpush1.xpose.msra.mxu0 0.0
    %2013 = vmatprep.subr.mxu0 0.0
    %2014 = vmatpush1.xpose.msra.mxu0 0.0
    %2015 = vmatprep.subr.mxu0 0.0
    %2016 = vmatpush1.xpose.msra.mxu0 0.0
    %2017 = vmatprep.subr.mxu0 0.0
    %2018 = vmatpush1.xpose.msra.mxu0 0.0
    %2019 = vmatprep.subr.mxu0 0.0
    %2020 = vmatpush1.xpose.msra.mxu0 0.0
    %2021 = vmatprep.subr.mxu0 0.0
    %2022 = vmatpush1.xpose.msra.mxu0 0.0
    %2023 = vmatprep.subr.mxu0 0.0
    %2024 = vmatpush1.xpose.msra.mxu0 0.0
    %2025 = vmatprep.subr.mxu0 0.0
    %2026 = vmatpush1.xpose.msra.mxu0 0.0
    %2027 = vmatprep.subr.mxu0 0.0
    %2028 = vmatpush1.xpose.msra.mxu0 0.0
    %2029 = vmatprep.subr.mxu0 0.0
    %2030 = vmatpush1.xpose.msra.mxu0 0.0
    %2031 = vmatprep.subr.mxu0 0.0
    %2032 = vmatpush1.xpose.msra.mxu0 0.0
    %2033 = vmatprep.subr.mxu0 0.0
    %2034 = vmatpush1.xpose.msra.mxu0 0.0
    %2035 = vmatprep.subr.mxu0 0.0
    %2036 = vmatpush1.xpose.msra.mxu0 0.0
    %2037 = vmatprep.subr.mxu0 0.0
    %2038 = vmatpush1.xpose.msra.mxu0 0.0
    %2039 = vmatprep.subr.mxu0 0.0
    %2040 = vmatpush1.xpose.msra.mxu0 0.0
    %2041 = vmatprep.mubr.f32.mxu0 0.0
    %2042 = vmatmul.mubr.f32.gmra.mrb[0].mxu0 %v26
    %v2043 = vpop.f32.mrb[0].mxu0
    %v2044 = vadd.f32 0.0, %v2043
    %v2045 = vpop.f32.mrb[0].mxu0
    %2046 = vdwg.mxu0
    %2047 = vst [vmem:[#allocation2] sm:$0xff] %v1834
    %2048 = vst [vmem:[#allocation2 + $0x8] sm:$0xff] %v1904
    %2049 = vst [vmem:[#allocation2 + $0x10] sm:$0xff] %v1974
    %2050 = vst [vmem:[#allocation2 + $0x18] sm:$0xff] %v2044
    // Predicated region
    $region14: #{qkv_attention_legacy.1} parent=1 // pred_check
      _
    $region15: #{qkv_attention_legacy.1} parent=1 // pred_check_branch
      %2052 = sbr.rel (0) target = $region17
    $region16: #{qkv_attention_legacy.1} parent=1 // pred_region
      %s2054 = ssub.s32 512, 512
      %2055 = vsyncadd [#allocation3], %s2054
      %s2056 = sshll.u32 [#allocation2], 4
      %s2057 = int_to_ptr.vmem [resolvable:$true] %s2056
      %2062 = dma.vmem_to_hbm [thread:$0]  %s2057, 512, %s3, [#allocation3], 128, 128, 8
    $region17: #{qkv_attention_legacy.1} parent=1 // pred_fallthru
      _
    // Predicated region
    $region18: #{qkv_attention_legacy.1} parent=1 // pred_check
      _
    $region19: #{qkv_attention_legacy.1} parent=1 // pred_check_branch
      %2064 = sbr.rel (0) target = $region21
    $region20: #{qkv_attention_legacy.1} parent=1 // pred_region
      %2065 = dma.done [#allocation3], 512
    $region21: #{qkv_attention_legacy.1} parent=1 // pred_fallthru
      _
    %2066 = vsyncpa [#allocation3], 1

</llo_original>
